<compile_context>
chip_gen: v7x
topology: tpu7x:2x2x1
jax: 0.10.0
libtpu: 0.0.40
codegen_flags: <defaults>
</compile_context>

<pallas_src>
from functools import partial

import jax
import jax.numpy as jnp
from jax.experimental import pallas as pl
from jax.experimental.pallas import tpu as pltpu


_NONE_DEPTH = 4  # region rows of gather DMAs kept in flight ('none' path)


def _kv_gather_none_kernel(r_idx_ref, kv_hbm, out_hbm, sems, *, topk, p2):
    """mul_weight='none': direct HBM->HBM gather DMAs, p2 loop inside kernel."""
    b = pl.program_id(0)
    depth = _NONE_DEPTH

    def start_row(row, slot):
        off = (b * p2 + row) * topk
        for k in range(topk):
            pltpu.make_async_copy(
                kv_hbm.at[b, r_idx_ref[off + k]],
                out_hbm.at[b, row, k],
                sems.at[slot, k],
            ).start()

    def wait_row(slot):
        # Shape-matched dummy descriptors: only the semaphore + byte count
        # matter for the wait, so no SMEM index re-reads here.
        for k in range(topk):
            pltpu.make_async_copy(
                kv_hbm.at[0, 0],
                out_hbm.at[0, 0, 0],
                sems.at[slot, k],
            ).wait()

    # Prime the first `depth` rows (static indices).
    for r in range(min(depth, p2)):
        start_row(r, r)

    @pl.loop(0, p2)
    def _(i):
        slot = i & (depth - 1)
        wait_row(slot)

        # Refill the slot we just drained with row i+depth.
        @pl.when(i + depth < p2)
        def _():
            start_row(i + depth, slot)


def _kv_gather_soft_kernel(r_idx_ref, r_w_ref, kv_hbm, out_ref, slab, sems,
                           *, topk, p2, r_fold, depth):
    """mul_weight='soft': multi-buffered VMEM gather of r_fold region rows per
    grid step + one vectorized f32 scale + one lane-dense block store."""
    b = pl.program_id(0)
    i = pl.program_id(1)                    # chunk index along p2 // r_fold
    nchunks = p2 // r_fold

    def start_chunk(chunk, slot):
        for rr in range(r_fold):
            off = (b * p2 + chunk * r_fold + rr) * topk
            for k in range(topk):
                pltpu.make_async_copy(
                    kv_hbm.at[b, r_idx_ref[off + k]],
                    slab.at[slot, rr, k],
                    sems.at[slot, rr, k],
                ).start()

    def wait_chunk(slot):
        for rr in range(r_fold):
            for k in range(topk):
                pltpu.make_async_copy(
                    kv_hbm.at[0, 0],
                    slab.at[slot, rr, k],
                    sems.at[slot, rr, k],
                ).wait()

    slot = i & (depth - 1)

    # Prime depth-1 chunks at the start of every batch row.
    n_prime = min(depth - 1, nchunks)
    if n_prime > 0:
        @pl.when(i == 0)
        def _():
            for c in range(n_prime):
                start_chunk(c, c)

    # Keep `depth` chunks in flight: refill the slot freed at step i-1 before
    # waiting on this step's chunk.
    @pl.when(i + depth - 1 < nchunks)
    def _():
        start_chunk(i + depth - 1, (i + depth - 1) & (depth - 1))

    wait_chunk(slot)

    # Single broadcasted multiply and one full lane-dense store (no per-k
    # masked sublane-1 loads/stores).
    w = r_w_ref[0].astype(jnp.float32)             # (r_fold, topk, 1)
    data = slab[slot].astype(jnp.float32)          # (r_fold, topk, w2c)
    out_ref[0] = (data * w).astype(out_ref.dtype)


def _pick_fold(p2, topk, w2c, itemsize):
    """Region rows gathered per 'soft' grid step: biggest divisor of p2 whose
    slab slot stays <= 512 KiB, preferring to leave >= 2 chunks so gather DMAs
    of chunk i+1 overlap the scale/store of chunk i."""
    row_bytes = topk * w2c * itemsize
    cap = 512 << 10
    divisors = [d for d in range(1, p2 + 1) if p2 % d == 0]
    fits = [d for d in divisors if d * row_bytes <= cap] or [1]
    pipelined = [d for d in fits if p2 // d >= 2]
    return max(pipelined) if pipelined else max(fits)


def kv_gather(r_idx, r_weight, kv, mul_weight="none"):
    """Pallas TPU implementation of KVGather.forward."""
    assert mul_weight in ("none", "soft", "hard")
    if mul_weight == "hard":
        # TODO(synk): 'hard' routing is NotImplemented in the reference module too.
        raise NotImplementedError("differentiable hard routing TBA")

    n, p2, w2, c_kv = kv.shape
    topk = r_idx.shape[-1]
    w2c = w2 * c_kv

    # Clamp indices so an out-of-range index cannot fault the DMA bounds check
    # (only diverges from the reference for invalid input).
    r_idx_flat = jnp.clip(r_idx.astype(jnp.int32), 0, p2 - 1).reshape(-1)
    # Lane-dense layout: fold (w2, c_kv) into one trailing axis (free reshape).
    kv2 = kv.reshape(n, p2, w2c)

    itemsize = jnp.dtype(kv.dtype).itemsize
    gathered_bytes = n * p2 * topk * w2c * itemsize
    cost = pl.CostEstimate(
        flops=(n * p2 * topk * w2c) if mul_weight == "soft" else 0,
        transcendentals=0,
        bytes_accessed=2 * gathered_bytes + r_idx_flat.size * 4,
    )
    kv_spec = pl.BlockSpec(memory_space=pl.ANY)   # raw HBM ref, manual DMA

    if mul_weight == "none":
        out_shape = jax.ShapeDtypeStruct((n, p2, topk, w2c), kv.dtype)
        grid_spec = pltpu.PrefetchScalarGridSpec(
            num_scalar_prefetch=1,                           # r_idx -> SMEM
            grid=(n,),
            in_specs=[kv_spec],
            out_specs=pl.BlockSpec(memory_space=pl.ANY),     # written via DMA
            scratch_shapes=[pltpu.SemaphoreType.DMA((_NONE_DEPTH, topk))],
        )
        out = pl.pallas_call(
            partial(_kv_gather_none_kernel, topk=topk, p2=p2),
            grid_spec=grid_spec,
            out_shape=out_shape,
            compiler_params=pltpu.CompilerParams(
                dimension_semantics=("parallel",)),
            cost_estimate=cost,
        )(r_idx_flat, kv2)
    else:  # 'soft'
        out_dtype = jnp.promote_types(kv.dtype, r_weight.dtype)
        r_fold = _pick_fold(p2, topk, w2c, itemsize)
        nchunks = p2 // r_fold
        depth = 1 if nchunks == 1 else (2 if nchunks < 4 else 4)
        r_w4 = r_weight.astype(jnp.float32).reshape(n, p2, topk, 1)

        out_shape = jax.ShapeDtypeStruct((n, p2, topk, w2c), out_dtype)
        grid_spec = pltpu.PrefetchScalarGridSpec(
            num_scalar_prefetch=1,                           # r_idx -> SMEM
            grid=(n, nchunks),
            in_specs=[
                pl.BlockSpec((1, r_fold, topk, 1),
                             lambda b, i, idx: (b, i, 0, 0)),   # r_weight (VMEM)
                kv_spec,                                        # kv (HBM)
            ],
            out_specs=pl.BlockSpec((1, r_fold, topk, w2c),
                                   lambda b, i, idx: (b, i, 0, 0)),
            scratch_shapes=[
                pltpu.VMEM((depth, r_fold, topk, w2c), kv.dtype),  # slab
                pltpu.SemaphoreType.DMA((depth, r_fold, topk)),
            ],
        )
        out = pl.pallas_call(
            partial(_kv_gather_soft_kernel, topk=topk, p2=p2,
                    r_fold=r_fold, depth=depth),
            grid_spec=grid_spec,
            out_shape=out_shape,
            compiler_params=pltpu.CompilerParams(
                dimension_semantics=("parallel", "arbitrary")),
            cost_estimate=cost,
        )(r_idx_flat, r_w4, kv2)

    return out.reshape(n, p2, topk, w2, c_kv)


def _kv_gather_ref(r_idx, r_weight, kv, mul_weight):
    n = kv.shape[0]
    gathered = kv[jnp.arange(n)[:, None, None], r_idx]  # (n, p2, topk, w2, c_kv)
    if mul_weight == "soft":
        gathered = r_weight[..., None, None] * gathered
    return gathered


if __name__ == "__main__":
    key = jax.random.PRNGKey(0)
    # Small shapes consistent with the module: region grid p2, window size w2.
    n, p2, w2, c_kv, topk = 2, 8, 8, 32, 4

    k1, k2, k3 = jax.random.split(key, 3)
    kv = jax.random.normal(k1, (n, p2, w2, c_kv), dtype=jnp.float32)
    r_idx = jax.random.randint(k2, (n, p2, topk), 0, p2).astype(jnp.int32)
    r_weight = jax.nn.softmax(jax.random.normal(k3, (n, p2, topk), jnp.float32), -1)

    ok = True
    for mode in ("none", "soft"):
        out = jax.block_until_ready(kv_gather(r_idx, r_weight, kv, mul_weight=mode))
        ref = _kv_gather_ref(r_idx, r_weight, kv, mode)
        assert out.shape == (n, p2, topk, w2, c_kv)
        ok = ok and bool(jnp.allclose(out, ref, atol=1e-6, rtol=1e-6))

    if ok:
        print("KERNEL_OK")
    else:
        print("KERNEL_MISMATCH")
</pallas_src>

<mosaic_0001>
module attributes {stable_mosaic.version = 11 : i64} {
  func.func @_kv_gather_none_kernel(%arg0: i32, %arg1: memref<64xi32, #tpu.memory_space<smem>>, %arg2: memref<2x8x256xf32, #tpu.memory_space<any>>, %arg3: memref<2x8x4x256xf32, #tpu.memory_space<any>>, %arg4: memref<4x4x!tpu.dma_semaphore, #tpu.memory_space<semaphore_mem>>) attributes {dimension_semantics = [#tpu.dimension_semantics<parallel>], iteration_bounds = array<i64: 2>, scalar_prefetch = 1 : i64, scratch_operands = 1 : i64, tpu.core_type = #tpu.core_type<tc>, window_params = [{}, {}]} {
    %c8_i32 = arith.constant 8 : i32
    %0 = arith.muli %arg0, %c8_i32 : i32
    %c0_i32 = arith.constant 0 : i32
    %1 = arith.addi %0, %c0_i32 : i32
    %c4_i32 = arith.constant 4 : i32
    %2 = arith.muli %1, %c4_i32 : i32
    %c0_i32_0 = arith.constant 0 : i32
    %3 = arith.addi %2, %c0_i32_0 : i32
    %4 = arith.index_cast %3 : i32 to index
    %5 = memref.load %arg1[%4] : memref<64xi32, #tpu.memory_space<smem>>
    %c0_i32_1 = arith.constant 0 : i32
    %c0_i32_2 = arith.constant 0 : i32
    %c0_i32_3 = arith.constant 0 : i32
    %c0_i32_4 = arith.constant 0 : i32
    %c0_i32_5 = arith.constant 0 : i32
    %6 = tpu.memref_slice %arg2[%arg0, %5, %c0_i32_5] : memref<2x8x256xf32, #tpu.memory_space<any>> -> memref<1x1x256xf32, #tpu.memory_space<any>>
    %7 = tpu.memref_squeeze %6 : memref<1x1x256xf32, #tpu.memory_space<any>> -> memref<256xf32, #tpu.memory_space<any>>
    %c0_i32_6 = arith.constant 0 : i32
    %8 = tpu.memref_slice %arg3[%arg0, %c0_i32_1, %c0_i32_2, %c0_i32_6] : memref<2x8x4x256xf32, #tpu.memory_space<any>> -> memref<1x1x1x256xf32, #tpu.memory_space<any>>
    %9 = tpu.memref_squeeze %8 : memref<1x1x1x256xf32, #tpu.memory_space<any>> -> memref<256xf32, #tpu.memory_space<any>>
    %10 = tpu.memref_slice %arg4[%c0_i32_3, %c0_i32_4] : memref<4x4x!tpu.dma_semaphore, #tpu.memory_space<semaphore_mem>> -> memref<1x1x!tpu.dma_semaphore, #tpu.memory_space<semaphore_mem>>
    %11 = tpu.memref_squeeze %10 : memref<1x1x!tpu.dma_semaphore, #tpu.memory_space<semaphore_mem>> -> memref<!tpu.dma_semaphore, #tpu.memory_space<semaphore_mem>>
    tpu.enqueue_dma source(%7 : memref<256xf32, #tpu.memory_space<any>>) target(%9 : memref<256xf32, #tpu.memory_space<any>>) target_semaphore(%11 : memref<!tpu.dma_semaphore, #tpu.memory_space<semaphore_mem>>)
    %c1_i32 = arith.constant 1 : i32
    %12 = arith.addi %2, %c1_i32 : i32
    %13 = arith.index_cast %12 : i32 to index
    %14 = memref.load %arg1[%13] : memref<64xi32, #tpu.memory_space<smem>>
    %c0_i32_7 = arith.constant 0 : i32
    %c1_i32_8 = arith.constant 1 : i32
    %c0_i32_9 = arith.constant 0 : i32
    %c1_i32_10 = arith.constant 1 : i32
    %c0_i32_11 = arith.constant 0 : i32
    %15 = tpu.memref_slice %arg2[%arg0, %14, %c0_i32_11] : memref<2x8x256xf32, #tpu.memory_space<any>> -> memref<1x1x256xf32, #tpu.memory_space<any>>
    %16 = tpu.memref_squeeze %15 : memref<1x1x256xf32, #tpu.memory_space<any>> -> memref<256xf32, #tpu.memory_space<any>>
    %c0_i32_12 = arith.constant 0 : i32
    %17 = tpu.memref_slice %arg3[%arg0, %c0_i32_7, %c1_i32_8, %c0_i32_12] : memref<2x8x4x256xf32, #tpu.memory_space<any>> -> memref<1x1x1x256xf32, #tpu.memory_space<any>>
    %18 = tpu.memref_squeeze %17 : memref<1x1x1x256xf32, #tpu.memory_space<any>> -> memref<256xf32, #tpu.memory_space<any>>
    %19 = tpu.memref_slice %arg4[%c0_i32_9, %c1_i32_10] : memref<4x4x!tpu.dma_semaphore, #tpu.memory_space<semaphore_mem>> -> memref<1x1x!tpu.dma_semaphore, #tpu.memory_space<semaphore_mem>>
    %20 = tpu.memref_squeeze %19 : memref<1x1x!tpu.dma_semaphore, #tpu.memory_space<semaphore_mem>> -> memref<!tpu.dma_semaphore, #tpu.memory_space<semaphore_mem>>
    tpu.enqueue_dma source(%16 : memref<256xf32, #tpu.memory_space<any>>) target(%18 : memref<256xf32, #tpu.memory_space<any>>) target_semaphore(%20 : memref<!tpu.dma_semaphore, #tpu.memory_space<semaphore_mem>>)
    %c2_i32 = arith.constant 2 : i32
    %21 = arith.addi %2, %c2_i32 : i32
    %22 = arith.index_cast %21 : i32 to index
    %23 = memref.load %arg1[%22] : memref<64xi32, #tpu.memory_space<smem>>
    %c0_i32_13 = arith.constant 0 : i32
    %c2_i32_14 = arith.constant 2 : i32
    %c0_i32_15 = arith.constant 0 : i32
    %c2_i32_16 = arith.constant 2 : i32
    %c0_i32_17 = arith.constant 0 : i32
    %24 = tpu.memref_slice %arg2[%arg0, %23, %c0_i32_17] : memref<2x8x256xf32, #tpu.memory_space<any>> -> memref<1x1x256xf32, #tpu.memory_space<any>>
    %25 = tpu.memref_squeeze %24 : memref<1x1x256xf32, #tpu.memory_space<any>> -> memref<256xf32, #tpu.memory_space<any>>
    %c0_i32_18 = arith.constant 0 : i32
    %26 = tpu.memref_slice %arg3[%arg0, %c0_i32_13, %c2_i32_14, %c0_i32_18] : memref<2x8x4x256xf32, #tpu.memory_space<any>> -> memref<1x1x1x256xf32, #tpu.memory_space<any>>
    %27 = tpu.memref_squeeze %26 : memref<1x1x1x256xf32, #tpu.memory_space<any>> -> memref<256xf32, #tpu.memory_space<any>>
    %28 = tpu.memref_slice %arg4[%c0_i32_15, %c2_i32_16] : memref<4x4x!tpu.dma_semaphore, #tpu.memory_space<semaphore_mem>> -> memref<1x1x!tpu.dma_semaphore, #tpu.memory_space<semaphore_mem>>
    %29 = tpu.memref_squeeze %28 : memref<1x1x!tpu.dma_semaphore, #tpu.memory_space<semaphore_mem>> -> memref<!tpu.dma_semaphore, #tpu.memory_space<semaphore_mem>>
    tpu.enqueue_dma source(%25 : memref<256xf32, #tpu.memory_space<any>>) target(%27 : memref<256xf32, #tpu.memory_space<any>>) target_semaphore(%29 : memref<!tpu.dma_semaphore, #tpu.memory_space<semaphore_mem>>)
    %c3_i32 = arith.constant 3 : i32
    %30 = arith.addi %2, %c3_i32 : i32
    %31 = arith.index_cast %30 : i32 to index
    %32 = memref.load %arg1[%31] : memref<64xi32, #tpu.memory_space<smem>>
    %c0_i32_19 = arith.constant 0 : i32
    %c3_i32_20 = arith.constant 3 : i32
    %c0_i32_21 = arith.constant 0 : i32
    %c3_i32_22 = arith.constant 3 : i32
    %c0_i32_23 = arith.constant 0 : i32
    %33 = tpu.memref_slice %arg2[%arg0, %32, %c0_i32_23] : memref<2x8x256xf32, #tpu.memory_space<any>> -> memref<1x1x256xf32, #tpu.memory_space<any>>
    %34 = tpu.memref_squeeze %33 : memref<1x1x256xf32, #tpu.memory_space<any>> -> memref<256xf32, #tpu.memory_space<any>>
    %c0_i32_24 = arith.constant 0 : i32
    %35 = tpu.memref_slice %arg3[%arg0, %c0_i32_19, %c3_i32_20, %c0_i32_24] : memref<2x8x4x256xf32, #tpu.memory_space<any>> -> memref<1x1x1x256xf32, #tpu.memory_space<any>>
    %36 = tpu.memref_squeeze %35 : memref<1x1x1x256xf32, #tpu.memory_space<any>> -> memref<256xf32, #tpu.memory_space<any>>
    %37 = tpu.memref_slice %arg4[%c0_i32_21, %c3_i32_22] : memref<4x4x!tpu.dma_semaphore, #tpu.memory_space<semaphore_mem>> -> memref<1x1x!tpu.dma_semaphore, #tpu.memory_space<semaphore_mem>>
    %38 = tpu.memref_squeeze %37 : memref<1x1x!tpu.dma_semaphore, #tpu.memory_space<semaphore_mem>> -> memref<!tpu.dma_semaphore, #tpu.memory_space<semaphore_mem>>
    tpu.enqueue_dma source(%34 : memref<256xf32, #tpu.memory_space<any>>) target(%36 : memref<256xf32, #tpu.memory_space<any>>) target_semaphore(%38 : memref<!tpu.dma_semaphore, #tpu.memory_space<semaphore_mem>>)
    %c8_i32_25 = arith.constant 8 : i32
    %39 = arith.muli %arg0, %c8_i32_25 : i32
    %c1_i32_26 = arith.constant 1 : i32
    %40 = arith.addi %39, %c1_i32_26 : i32
    %c4_i32_27 = arith.constant 4 : i32
    %41 = arith.muli %40, %c4_i32_27 : i32
    %c0_i32_28 = arith.constant 0 : i32
    %42 = arith.addi %41, %c0_i32_28 : i32
    %43 = arith.index_cast %42 : i32 to index
    %44 = memref.load %arg1[%43] : memref<64xi32, #tpu.memory_space<smem>>
    %c1_i32_29 = arith.constant 1 : i32
    %c0_i32_30 = arith.constant 0 : i32
    %c1_i32_31 = arith.constant 1 : i32
    %c0_i32_32 = arith.constant 0 : i32
    %c0_i32_33 = arith.constant 0 : i32
    %45 = tpu.memref_slice %arg2[%arg0, %44, %c0_i32_33] : memref<2x8x256xf32, #tpu.memory_space<any>> -> memref<1x1x256xf32, #tpu.memory_space<any>>
    %46 = tpu.memref_squeeze %45 : memref<1x1x256xf32, #tpu.memory_space<any>> -> memref<256xf32, #tpu.memory_space<any>>
    %c0_i32_34 = arith.constant 0 : i32
    %47 = tpu.memref_slice %arg3[%arg0, %c1_i32_29, %c0_i32_30, %c0_i32_34] : memref<2x8x4x256xf32, #tpu.memory_space<any>> -> memref<1x1x1x256xf32, #tpu.memory_space<any>>
    %48 = tpu.memref_squeeze %47 : memref<1x1x1x256xf32, #tpu.memory_space<any>> -> memref<256xf32, #tpu.memory_space<any>>
    %49 = tpu.memref_slice %arg4[%c1_i32_31, %c0_i32_32] : memref<4x4x!tpu.dma_semaphore, #tpu.memory_space<semaphore_mem>> -> memref<1x1x!tpu.dma_semaphore, #tpu.memory_space<semaphore_mem>>
    %50 = tpu.memref_squeeze %49 : memref<1x1x!tpu.dma_semaphore, #tpu.memory_space<semaphore_mem>> -> memref<!tpu.dma_semaphore, #tpu.memory_space<semaphore_mem>>
    tpu.enqueue_dma source(%46 : memref<256xf32, #tpu.memory_space<any>>) target(%48 : memref<256xf32, #tpu.memory_space<any>>) target_semaphore(%50 : memref<!tpu.dma_semaphore, #tpu.memory_space<semaphore_mem>>)
    %c1_i32_35 = arith.constant 1 : i32
    %51 = arith.addi %41, %c1_i32_35 : i32
    %52 = arith.index_cast %51 : i32 to index
    %53 = memref.load %arg1[%52] : memref<64xi32, #tpu.memory_space<smem>>
    %c1_i32_36 = arith.constant 1 : i32
    %c1_i32_37 = arith.constant 1 : i32
    %c1_i32_38 = arith.constant 1 : i32
    %c1_i32_39 = arith.constant 1 : i32
    %c0_i32_40 = arith.constant 0 : i32
    %54 = tpu.memref_slice %arg2[%arg0, %53, %c0_i32_40] : memref<2x8x256xf32, #tpu.memory_space<any>> -> memref<1x1x256xf32, #tpu.memory_space<any>>
    %55 = tpu.memref_squeeze %54 : memref<1x1x256xf32, #tpu.memory_space<any>> -> memref<256xf32, #tpu.memory_space<any>>
    %c0_i32_41 = arith.constant 0 : i32
    %56 = tpu.memref_slice %arg3[%arg0, %c1_i32_36, %c1_i32_37, %c0_i32_41] : memref<2x8x4x256xf32, #tpu.memory_space<any>> -> memref<1x1x1x256xf32, #tpu.memory_space<any>>
    %57 = tpu.memref_squeeze %56 : memref<1x1x1x256xf32, #tpu.memory_space<any>> -> memref<256xf32, #tpu.memory_space<any>>
    %58 = tpu.memref_slice %arg4[%c1_i32_38, %c1_i32_39] : memref<4x4x!tpu.dma_semaphore, #tpu.memory_space<semaphore_mem>> -> memref<1x1x!tpu.dma_semaphore, #tpu.memory_space<semaphore_mem>>
    %59 = tpu.memref_squeeze %58 : memref<1x1x!tpu.dma_semaphore, #tpu.memory_space<semaphore_mem>> -> memref<!tpu.dma_semaphore, #tpu.memory_space<semaphore_mem>>
    tpu.enqueue_dma source(%55 : memref<256xf32, #tpu.memory_space<any>>) target(%57 : memref<256xf32, #tpu.memory_space<any>>) target_semaphore(%59 : memref<!tpu.dma_semaphore, #tpu.memory_space<semaphore_mem>>)
    %c2_i32_42 = arith.constant 2 : i32
    %60 = arith.addi %41, %c2_i32_42 : i32
    %61 = arith.index_cast %60 : i32 to index
    %62 = memref.load %arg1[%61] : memref<64xi32, #tpu.memory_space<smem>>
    %c1_i32_43 = arith.constant 1 : i32
    %c2_i32_44 = arith.constant 2 : i32
    %c1_i32_45 = arith.constant 1 : i32
    %c2_i32_46 = arith.constant 2 : i32
    %c0_i32_47 = arith.constant 0 : i32
    %63 = tpu.memref_slice %arg2[%arg0, %62, %c0_i32_47] : memref<2x8x256xf32, #tpu.memory_space<any>> -> memref<1x1x256xf32, #tpu.memory_space<any>>
    %64 = tpu.memref_squeeze %63 : memref<1x1x256xf32, #tpu.memory_space<any>> -> memref<256xf32, #tpu.memory_space<any>>
    %c0_i32_48 = arith.constant 0 : i32
    %65 = tpu.memref_slice %arg3[%arg0, %c1_i32_43, %c2_i32_44, %c0_i32_48] : memref<2x8x4x256xf32, #tpu.memory_space<any>> -> memref<1x1x1x256xf32, #tpu.memory_space<any>>
    %66 = tpu.memref_squeeze %65 : memref<1x1x1x256xf32, #tpu.memory_space<any>> -> memref<256xf32, #tpu.memory_space<any>>
    %67 = tpu.memref_slice %arg4[%c1_i32_45, %c2_i32_46] : memref<4x4x!tpu.dma_semaphore, #tpu.memory_space<semaphore_mem>> -> memref<1x1x!tpu.dma_semaphore, #tpu.memory_space<semaphore_mem>>
    %68 = tpu.memref_squeeze %67 : memref<1x1x!tpu.dma_semaphore, #tpu.memory_space<semaphore_mem>> -> memref<!tpu.dma_semaphore, #tpu.memory_space<semaphore_mem>>
    tpu.enqueue_dma source(%64 : memref<256xf32, #tpu.memory_space<any>>) target(%66 : memref<256xf32, #tpu.memory_space<any>>) target_semaphore(%68 : memref<!tpu.dma_semaphore, #tpu.memory_space<semaphore_mem>>)
    %c3_i32_49 = arith.constant 3 : i32
    %69 = arith.addi %41, %c3_i32_49 : i32
    %70 = arith.index_cast %69 : i32 to index
    %71 = memref.load %arg1[%70] : memref<64xi32, #tpu.memory_space<smem>>
    %c1_i32_50 = arith.constant 1 : i32
    %c3_i32_51 = arith.constant 3 : i32
    %c1_i32_52 = arith.constant 1 : i32
    %c3_i32_53 = arith.constant 3 : i32
    %c0_i32_54 = arith.constant 0 : i32
    %72 = tpu.memref_slice %arg2[%arg0, %71, %c0_i32_54] : memref<2x8x256xf32, #tpu.memory_space<any>> -> memref<1x1x256xf32, #tpu.memory_space<any>>
    %73 = tpu.memref_squeeze %72 : memref<1x1x256xf32, #tpu.memory_space<any>> -> memref<256xf32, #tpu.memory_space<any>>
    %c0_i32_55 = arith.constant 0 : i32
    %74 = tpu.memref_slice %arg3[%arg0, %c1_i32_50, %c3_i32_51, %c0_i32_55] : memref<2x8x4x256xf32, #tpu.memory_space<any>> -> memref<1x1x1x256xf32, #tpu.memory_space<any>>
    %75 = tpu.memref_squeeze %74 : memref<1x1x1x256xf32, #tpu.memory_space<any>> -> memref<256xf32, #tpu.memory_space<any>>
    %76 = tpu.memref_slice %arg4[%c1_i32_52, %c3_i32_53] : memref<4x4x!tpu.dma_semaphore, #tpu.memory_space<semaphore_mem>> -> memref<1x1x!tpu.dma_semaphore, #tpu.memory_space<semaphore_mem>>
    %77 = tpu.memref_squeeze %76 : memref<1x1x!tpu.dma_semaphore, #tpu.memory_space<semaphore_mem>> -> memref<!tpu.dma_semaphore, #tpu.memory_space<semaphore_mem>>
    tpu.enqueue_dma source(%73 : memref<256xf32, #tpu.memory_space<any>>) target(%75 : memref<256xf32, #tpu.memory_space<any>>) target_semaphore(%77 : memref<!tpu.dma_semaphore, #tpu.memory_space<semaphore_mem>>)
    %c8_i32_56 = arith.constant 8 : i32
    %78 = arith.muli %arg0, %c8_i32_56 : i32
    %c2_i32_57 = arith.constant 2 : i32
    %79 = arith.addi %78, %c2_i32_57 : i32
    %c4_i32_58 = arith.constant 4 : i32
    %80 = arith.muli %79, %c4_i32_58 : i32
    %c0_i32_59 = arith.constant 0 : i32
    %81 = arith.addi %80, %c0_i32_59 : i32
    %82 = arith.index_cast %81 : i32 to index
    %83 = memref.load %arg1[%82] : memref<64xi32, #tpu.memory_space<smem>>
    %c2_i32_60 = arith.constant 2 : i32
    %c0_i32_61 = arith.constant 0 : i32
    %c2_i32_62 = arith.constant 2 : i32
    %c0_i32_63 = arith.constant 0 : i32
    %c0_i32_64 = arith.constant 0 : i32
    %84 = tpu.memref_slice %arg2[%arg0, %83, %c0_i32_64] : memref<2x8x256xf32, #tpu.memory_space<any>> -> memref<1x1x256xf32, #tpu.memory_space<any>>
    %85 = tpu.memref_squeeze %84 : memref<1x1x256xf32, #tpu.memory_space<any>> -> memref<256xf32, #tpu.memory_space<any>>
    %c0_i32_65 = arith.constant 0 : i32
    %86 = tpu.memref_slice %arg3[%arg0, %c2_i32_60, %c0_i32_61, %c0_i32_65] : memref<2x8x4x256xf32, #tpu.memory_space<any>> -> memref<1x1x1x256xf32, #tpu.memory_space<any>>
    %87 = tpu.memref_squeeze %86 : memref<1x1x1x256xf32, #tpu.memory_space<any>> -> memref<256xf32, #tpu.memory_space<any>>
    %88 = tpu.memref_slice %arg4[%c2_i32_62, %c0_i32_63] : memref<4x4x!tpu.dma_semaphore, #tpu.memory_space<semaphore_mem>> -> memref<1x1x!tpu.dma_semaphore, #tpu.memory_space<semaphore_mem>>
    %89 = tpu.memref_squeeze %88 : memref<1x1x!tpu.dma_semaphore, #tpu.memory_space<semaphore_mem>> -> memref<!tpu.dma_semaphore, #tpu.memory_space<semaphore_mem>>
    tpu.enqueue_dma source(%85 : memref<256xf32, #tpu.memory_space<any>>) target(%87 : memref<256xf32, #tpu.memory_space<any>>) target_semaphore(%89 : memref<!tpu.dma_semaphore, #tpu.memory_space<semaphore_mem>>)
    %c1_i32_66 = arith.constant 1 : i32
    %90 = arith.addi %80, %c1_i32_66 : i32
    %91 = arith.index_cast %90 : i32 to index
    %92 = memref.load %arg1[%91] : memref<64xi32, #tpu.memory_space<smem>>
    %c2_i32_67 = arith.constant 2 : i32
    %c1_i32_68 = arith.constant 1 : i32
    %c2_i32_69 = arith.constant 2 : i32
    %c1_i32_70 = arith.constant 1 : i32
    %c0_i32_71 = arith.constant 0 : i32
    %93 = tpu.memref_slice %arg2[%arg0, %92, %c0_i32_71] : memref<2x8x256xf32, #tpu.memory_space<any>> -> memref<1x1x256xf32, #tpu.memory_space<any>>
    %94 = tpu.memref_squeeze %93 : memref<1x1x256xf32, #tpu.memory_space<any>> -> memref<256xf32, #tpu.memory_space<any>>
    %c0_i32_72 = arith.constant 0 : i32
    %95 = tpu.memref_slice %arg3[%arg0, %c2_i32_67, %c1_i32_68, %c0_i32_72] : memref<2x8x4x256xf32, #tpu.memory_space<any>> -> memref<1x1x1x256xf32, #tpu.memory_space<any>>
    %96 = tpu.memref_squeeze %95 : memref<1x1x1x256xf32, #tpu.memory_space<any>> -> memref<256xf32, #tpu.memory_space<any>>
    %97 = tpu.memref_slice %arg4[%c2_i32_69, %c1_i32_70] : memref<4x4x!tpu.dma_semaphore, #tpu.memory_space<semaphore_mem>> -> memref<1x1x!tpu.dma_semaphore, #tpu.memory_space<semaphore_mem>>
    %98 = tpu.memref_squeeze %97 : memref<1x1x!tpu.dma_semaphore, #tpu.memory_space<semaphore_mem>> -> memref<!tpu.dma_semaphore, #tpu.memory_space<semaphore_mem>>
    tpu.enqueue_dma source(%94 : memref<256xf32, #tpu.memory_space<any>>) target(%96 : memref<256xf32, #tpu.memory_space<any>>) target_semaphore(%98 : memref<!tpu.dma_semaphore, #tpu.memory_space<semaphore_mem>>)
    %c2_i32_73 = arith.constant 2 : i32
    %99 = arith.addi %80, %c2_i32_73 : i32
    %100 = arith.index_cast %99 : i32 to index
    %101 = memref.load %arg1[%100] : memref<64xi32, #tpu.memory_space<smem>>
    %c2_i32_74 = arith.constant 2 : i32
    %c2_i32_75 = arith.constant 2 : i32
    %c2_i32_76 = arith.constant 2 : i32
    %c2_i32_77 = arith.constant 2 : i32
    %c0_i32_78 = arith.constant 0 : i32
    %102 = tpu.memref_slice %arg2[%arg0, %101, %c0_i32_78] : memref<2x8x256xf32, #tpu.memory_space<any>> -> memref<1x1x256xf32, #tpu.memory_space<any>>
    %103 = tpu.memref_squeeze %102 : memref<1x1x256xf32, #tpu.memory_space<any>> -> memref<256xf32, #tpu.memory_space<any>>
    %c0_i32_79 = arith.constant 0 : i32
    %104 = tpu.memref_slice %arg3[%arg0, %c2_i32_74, %c2_i32_75, %c0_i32_79] : memref<2x8x4x256xf32, #tpu.memory_space<any>> -> memref<1x1x1x256xf32, #tpu.memory_space<any>>
    %105 = tpu.memref_squeeze %104 : memref<1x1x1x256xf32, #tpu.memory_space<any>> -> memref<256xf32, #tpu.memory_space<any>>
    %106 = tpu.memref_slice %arg4[%c2_i32_76, %c2_i32_77] : memref<4x4x!tpu.dma_semaphore, #tpu.memory_space<semaphore_mem>> -> memref<1x1x!tpu.dma_semaphore, #tpu.memory_space<semaphore_mem>>
    %107 = tpu.memref_squeeze %106 : memref<1x1x!tpu.dma_semaphore, #tpu.memory_space<semaphore_mem>> -> memref<!tpu.dma_semaphore, #tpu.memory_space<semaphore_mem>>
    tpu.enqueue_dma source(%103 : memref<256xf32, #tpu.memory_space<any>>) target(%105 : memref<256xf32, #tpu.memory_space<any>>) target_semaphore(%107 : memref<!tpu.dma_semaphore, #tpu.memory_space<semaphore_mem>>)
    %c3_i32_80 = arith.constant 3 : i32
    %108 = arith.addi %80, %c3_i32_80 : i32
    %109 = arith.index_cast %108 : i32 to index
    %110 = memref.load %arg1[%109] : memref<64xi32, #tpu.memory_space<smem>>
    %c2_i32_81 = arith.constant 2 : i32
    %c3_i32_82 = arith.constant 3 : i32
    %c2_i32_83 = arith.constant 2 : i32
    %c3_i32_84 = arith.constant 3 : i32
    %c0_i32_85 = arith.constant 0 : i32
    %111 = tpu.memref_slice %arg2[%arg0, %110, %c0_i32_85] : memref<2x8x256xf32, #tpu.memory_space<any>> -> memref<1x1x256xf32, #tpu.memory_space<any>>
    %112 = tpu.memref_squeeze %111 : memref<1x1x256xf32, #tpu.memory_space<any>> -> memref<256xf32, #tpu.memory_space<any>>
    %c0_i32_86 = arith.constant 0 : i32
    %113 = tpu.memref_slice %arg3[%arg0, %c2_i32_81, %c3_i32_82, %c0_i32_86] : memref<2x8x4x256xf32, #tpu.memory_space<any>> -> memref<1x1x1x256xf32, #tpu.memory_space<any>>
    %114 = tpu.memref_squeeze %113 : memref<1x1x1x256xf32, #tpu.memory_space<any>> -> memref<256xf32, #tpu.memory_space<any>>
    %115 = tpu.memref_slice %arg4[%c2_i32_83, %c3_i32_84] : memref<4x4x!tpu.dma_semaphore, #tpu.memory_space<semaphore_mem>> -> memref<1x1x!tpu.dma_semaphore, #tpu.memory_space<semaphore_mem>>
    %116 = tpu.memref_squeeze %115 : memref<1x1x!tpu.dma_semaphore, #tpu.memory_space<semaphore_mem>> -> memref<!tpu.dma_semaphore, #tpu.memory_space<semaphore_mem>>
    tpu.enqueue_dma source(%112 : memref<256xf32, #tpu.memory_space<any>>) target(%114 : memref<256xf32, #tpu.memory_space<any>>) target_semaphore(%116 : memref<!tpu.dma_semaphore, #tpu.memory_space<semaphore_mem>>)
    %c8_i32_87 = arith.constant 8 : i32
    %117 = arith.muli %arg0, %c8_i32_87 : i32
    %c3_i32_88 = arith.constant 3 : i32
    %118 = arith.addi %117, %c3_i32_88 : i32
    %c4_i32_89 = arith.constant 4 : i32
    %119 = arith.muli %118, %c4_i32_89 : i32
    %c0_i32_90 = arith.constant 0 : i32
    %120 = arith.addi %119, %c0_i32_90 : i32
    %121 = arith.index_cast %120 : i32 to index
    %122 = memref.load %arg1[%121] : memref<64xi32, #tpu.memory_space<smem>>
    %c3_i32_91 = arith.constant 3 : i32
    %c0_i32_92 = arith.constant 0 : i32
    %c3_i32_93 = arith.constant 3 : i32
    %c0_i32_94 = arith.constant 0 : i32
    %c0_i32_95 = arith.constant 0 : i32
    %123 = tpu.memref_slice %arg2[%arg0, %122, %c0_i32_95] : memref<2x8x256xf32, #tpu.memory_space<any>> -> memref<1x1x256xf32, #tpu.memory_space<any>>
    %124 = tpu.memref_squeeze %123 : memref<1x1x256xf32, #tpu.memory_space<any>> -> memref<256xf32, #tpu.memory_space<any>>
    %c0_i32_96 = arith.constant 0 : i32
    %125 = tpu.memref_slice %arg3[%arg0, %c3_i32_91, %c0_i32_92, %c0_i32_96] : memref<2x8x4x256xf32, #tpu.memory_space<any>> -> memref<1x1x1x256xf32, #tpu.memory_space<any>>
    %126 = tpu.memref_squeeze %125 : memref<1x1x1x256xf32, #tpu.memory_space<any>> -> memref<256xf32, #tpu.memory_space<any>>
    %127 = tpu.memref_slice %arg4[%c3_i32_93, %c0_i32_94] : memref<4x4x!tpu.dma_semaphore, #tpu.memory_space<semaphore_mem>> -> memref<1x1x!tpu.dma_semaphore, #tpu.memory_space<semaphore_mem>>
    %128 = tpu.memref_squeeze %127 : memref<1x1x!tpu.dma_semaphore, #tpu.memory_space<semaphore_mem>> -> memref<!tpu.dma_semaphore, #tpu.memory_space<semaphore_mem>>
    tpu.enqueue_dma source(%124 : memref<256xf32, #tpu.memory_space<any>>) target(%126 : memref<256xf32, #tpu.memory_space<any>>) target_semaphore(%128 : memref<!tpu.dma_semaphore, #tpu.memory_space<semaphore_mem>>)
    %c1_i32_97 = arith.constant 1 : i32
    %129 = arith.addi %119, %c1_i32_97 : i32
    %130 = arith.index_cast %129 : i32 to index
    %131 = memref.load %arg1[%130] : memref<64xi32, #tpu.memory_space<smem>>
    %c3_i32_98 = arith.constant 3 : i32
    %c1_i32_99 = arith.constant 1 : i32
    %c3_i32_100 = arith.constant 3 : i32
    %c1_i32_101 = arith.constant 1 : i32
    %c0_i32_102 = arith.constant 0 : i32
    %132 = tpu.memref_slice %arg2[%arg0, %131, %c0_i32_102] : memref<2x8x256xf32, #tpu.memory_space<any>> -> memref<1x1x256xf32, #tpu.memory_space<any>>
    %133 = tpu.memref_squeeze %132 : memref<1x1x256xf32, #tpu.memory_space<any>> -> memref<256xf32, #tpu.memory_space<any>>
    %c0_i32_103 = arith.constant 0 : i32
    %134 = tpu.memref_slice %arg3[%arg0, %c3_i32_98, %c1_i32_99, %c0_i32_103] : memref<2x8x4x256xf32, #tpu.memory_space<any>> -> memref<1x1x1x256xf32, #tpu.memory_space<any>>
    %135 = tpu.memref_squeeze %134 : memref<1x1x1x256xf32, #tpu.memory_space<any>> -> memref<256xf32, #tpu.memory_space<any>>
    %136 = tpu.memref_slice %arg4[%c3_i32_100, %c1_i32_101] : memref<4x4x!tpu.dma_semaphore, #tpu.memory_space<semaphore_mem>> -> memref<1x1x!tpu.dma_semaphore, #tpu.memory_space<semaphore_mem>>
    %137 = tpu.memref_squeeze %136 : memref<1x1x!tpu.dma_semaphore, #tpu.memory_space<semaphore_mem>> -> memref<!tpu.dma_semaphore, #tpu.memory_space<semaphore_mem>>
    tpu.enqueue_dma source(%133 : memref<256xf32, #tpu.memory_space<any>>) target(%135 : memref<256xf32, #tpu.memory_space<any>>) target_semaphore(%137 : memref<!tpu.dma_semaphore, #tpu.memory_space<semaphore_mem>>)
    %c2_i32_104 = arith.constant 2 : i32
    %138 = arith.addi %119, %c2_i32_104 : i32
    %139 = arith.index_cast %138 : i32 to index
    %140 = memref.load %arg1[%139] : memref<64xi32, #tpu.memory_space<smem>>
    %c3_i32_105 = arith.constant 3 : i32
    %c2_i32_106 = arith.constant 2 : i32
    %c3_i32_107 = arith.constant 3 : i32
    %c2_i32_108 = arith.constant 2 : i32
    %c0_i32_109 = arith.constant 0 : i32
    %141 = tpu.memref_slice %arg2[%arg0, %140, %c0_i32_109] : memref<2x8x256xf32, #tpu.memory_space<any>> -> memref<1x1x256xf32, #tpu.memory_space<any>>
    %142 = tpu.memref_squeeze %141 : memref<1x1x256xf32, #tpu.memory_space<any>> -> memref<256xf32, #tpu.memory_space<any>>
    %c0_i32_110 = arith.constant 0 : i32
    %143 = tpu.memref_slice %arg3[%arg0, %c3_i32_105, %c2_i32_106, %c0_i32_110] : memref<2x8x4x256xf32, #tpu.memory_space<any>> -> memref<1x1x1x256xf32, #tpu.memory_space<any>>
    %144 = tpu.memref_squeeze %143 : memref<1x1x1x256xf32, #tpu.memory_space<any>> -> memref<256xf32, #tpu.memory_space<any>>
    %145 = tpu.memref_slice %arg4[%c3_i32_107, %c2_i32_108] : memref<4x4x!tpu.dma_semaphore, #tpu.memory_space<semaphore_mem>> -> memref<1x1x!tpu.dma_semaphore, #tpu.memory_space<semaphore_mem>>
    %146 = tpu.memref_squeeze %145 : memref<1x1x!tpu.dma_semaphore, #tpu.memory_space<semaphore_mem>> -> memref<!tpu.dma_semaphore, #tpu.memory_space<semaphore_mem>>
    tpu.enqueue_dma source(%142 : memref<256xf32, #tpu.memory_space<any>>) target(%144 : memref<256xf32, #tpu.memory_space<any>>) target_semaphore(%146 : memref<!tpu.dma_semaphore, #tpu.memory_space<semaphore_mem>>)
    %c3_i32_111 = arith.constant 3 : i32
    %147 = arith.addi %119, %c3_i32_111 : i32
    %148 = arith.index_cast %147 : i32 to index
    %149 = memref.load %arg1[%148] : memref<64xi32, #tpu.memory_space<smem>>
    %c3_i32_112 = arith.constant 3 : i32
    %c3_i32_113 = arith.constant 3 : i32
    %c3_i32_114 = arith.constant 3 : i32
    %c3_i32_115 = arith.constant 3 : i32
    %c0_i32_116 = arith.constant 0 : i32
    %150 = tpu.memref_slice %arg2[%arg0, %149, %c0_i32_116] : memref<2x8x256xf32, #tpu.memory_space<any>> -> memref<1x1x256xf32, #tpu.memory_space<any>>
    %151 = tpu.memref_squeeze %150 : memref<1x1x256xf32, #tpu.memory_space<any>> -> memref<256xf32, #tpu.memory_space<any>>
    %c0_i32_117 = arith.constant 0 : i32
    %152 = tpu.memref_slice %arg3[%arg0, %c3_i32_112, %c3_i32_113, %c0_i32_117] : memref<2x8x4x256xf32, #tpu.memory_space<any>> -> memref<1x1x1x256xf32, #tpu.memory_space<any>>
    %153 = tpu.memref_squeeze %152 : memref<1x1x1x256xf32, #tpu.memory_space<any>> -> memref<256xf32, #tpu.memory_space<any>>
    %154 = tpu.memref_slice %arg4[%c3_i32_114, %c3_i32_115] : memref<4x4x!tpu.dma_semaphore, #tpu.memory_space<semaphore_mem>> -> memref<1x1x!tpu.dma_semaphore, #tpu.memory_space<semaphore_mem>>
    %155 = tpu.memref_squeeze %154 : memref<1x1x!tpu.dma_semaphore, #tpu.memory_space<semaphore_mem>> -> memref<!tpu.dma_semaphore, #tpu.memory_space<semaphore_mem>>
    tpu.enqueue_dma source(%151 : memref<256xf32, #tpu.memory_space<any>>) target(%153 : memref<256xf32, #tpu.memory_space<any>>) target_semaphore(%155 : memref<!tpu.dma_semaphore, #tpu.memory_space<semaphore_mem>>)
    %c0_i32_118 = arith.constant 0 : i32
    %c8_i32_119 = arith.constant 8 : i32
    %156 = arith.addi %c0_i32_118, %c8_i32_119 : i32
    %c1_i32_120 = arith.constant 1 : i32
    scf.for %arg5 = %c0_i32_118 to %156 step %c1_i32_120  : i32 {
      %c1_i32_122 = arith.constant 1 : i32
      %157 = arith.muli %arg5, %c1_i32_122 : i32
      %c0_i32_123 = arith.constant 0 : i32
      %158 = arith.addi %c0_i32_123, %157 : i32
      %c3_i32_124 = arith.constant 3 : i32
      %159 = arith.andi %158, %c3_i32_124 : i32
      %c0_i32_125 = arith.constant 0 : i32
      %c0_i32_126 = arith.constant 0 : i32
      %c0_i32_127 = arith.constant 0 : i32
      %c0_i32_128 = arith.constant 0 : i32
      %c0_i32_129 = arith.constant 0 : i32
      %c0_i32_130 = arith.constant 0 : i32
      %c0_i32_131 = arith.constant 0 : i32
      %160 = tpu.memref_slice %arg2[%c0_i32_125, %c0_i32_126, %c0_i32_131] : memref<2x8x256xf32, #tpu.memory_space<any>> -> memref<1x1x256xf32, #tpu.memory_space<any>>
      %161 = tpu.memref_squeeze %160 : memref<1x1x256xf32, #tpu.memory_space<any>> -> memref<256xf32, #tpu.memory_space<any>>
      %c0_i32_132 = arith.constant 0 : i32
      %162 = tpu.memref_slice %arg3[%c0_i32_127, %c0_i32_128, %c0_i32_129, %c0_i32_132] : memref<2x8x4x256xf32, #tpu.memory_space<any>> -> memref<1x1x1x256xf32, #tpu.memory_space<any>>
      %163 = tpu.memref_squeeze %162 : memref<1x1x1x256xf32, #tpu.memory_space<any>> -> memref<256xf32, #tpu.memory_space<any>>
      %164 = tpu.memref_slice %arg4[%159, %c0_i32_130] : memref<4x4x!tpu.dma_semaphore, #tpu.memory_space<semaphore_mem>> -> memref<1x1x!tpu.dma_semaphore, #tpu.memory_space<semaphore_mem>>
      %165 = tpu.memref_squeeze %164 : memref<1x1x!tpu.dma_semaphore, #tpu.memory_space<semaphore_mem>> -> memref<!tpu.dma_semaphore, #tpu.memory_space<semaphore_mem>>
      tpu.wait_dma2 semaphore(%165 : memref<!tpu.dma_semaphore, #tpu.memory_space<semaphore_mem>>) src(%161 : memref<256xf32, #tpu.memory_space<any>>) dst(%163 : memref<256xf32, #tpu.memory_space<any>>)
      %c0_i32_133 = arith.constant 0 : i32
      %c0_i32_134 = arith.constant 0 : i32
      %c0_i32_135 = arith.constant 0 : i32
      %c0_i32_136 = arith.constant 0 : i32
      %c0_i32_137 = arith.constant 0 : i32
      %c1_i32_138 = arith.constant 1 : i32
      %c0_i32_139 = arith.constant 0 : i32
      %166 = tpu.memref_slice %arg2[%c0_i32_133, %c0_i32_134, %c0_i32_139] : memref<2x8x256xf32, #tpu.memory_space<any>> -> memref<1x1x256xf32, #tpu.memory_space<any>>
      %167 = tpu.memref_squeeze %166 : memref<1x1x256xf32, #tpu.memory_space<any>> -> memref<256xf32, #tpu.memory_space<any>>
      %c0_i32_140 = arith.constant 0 : i32
      %168 = tpu.memref_slice %arg3[%c0_i32_135, %c0_i32_136, %c0_i32_137, %c0_i32_140] : memref<2x8x4x256xf32, #tpu.memory_space<any>> -> memref<1x1x1x256xf32, #tpu.memory_space<any>>
      %169 = tpu.memref_squeeze %168 : memref<1x1x1x256xf32, #tpu.memory_space<any>> -> memref<256xf32, #tpu.memory_space<any>>
      %170 = tpu.memref_slice %arg4[%159, %c1_i32_138] : memref<4x4x!tpu.dma_semaphore, #tpu.memory_space<semaphore_mem>> -> memref<1x1x!tpu.dma_semaphore, #tpu.memory_space<semaphore_mem>>
      %171 = tpu.memref_squeeze %170 : memref<1x1x!tpu.dma_semaphore, #tpu.memory_space<semaphore_mem>> -> memref<!tpu.dma_semaphore, #tpu.memory_space<semaphore_mem>>
      tpu.wait_dma2 semaphore(%171 : memref<!tpu.dma_semaphore, #tpu.memory_space<semaphore_mem>>) src(%167 : memref<256xf32, #tpu.memory_space<any>>) dst(%169 : memref<256xf32, #tpu.memory_space<any>>)
      %c0_i32_141 = arith.constant 0 : i32
      %c0_i32_142 = arith.constant 0 : i32
      %c0_i32_143 = arith.constant 0 : i32
      %c0_i32_144 = arith.constant 0 : i32
      %c0_i32_145 = arith.constant 0 : i32
      %c2_i32_146 = arith.constant 2 : i32
      %c0_i32_147 = arith.constant 0 : i32
      %172 = tpu.memref_slice %arg2[%c0_i32_141, %c0_i32_142, %c0_i32_147] : memref<2x8x256xf32, #tpu.memory_space<any>> -> memref<1x1x256xf32, #tpu.memory_space<any>>
      %173 = tpu.memref_squeeze %172 : memref<1x1x256xf32, #tpu.memory_space<any>> -> memref<256xf32, #tpu.memory_space<any>>
      %c0_i32_148 = arith.constant 0 : i32
      %174 = tpu.memref_slice %arg3[%c0_i32_143, %c0_i32_144, %c0_i32_145, %c0_i32_148] : memref<2x8x4x256xf32, #tpu.memory_space<any>> -> memref<1x1x1x256xf32, #tpu.memory_space<any>>
      %175 = tpu.memref_squeeze %174 : memref<1x1x1x256xf32, #tpu.memory_space<any>> -> memref<256xf32, #tpu.memory_space<any>>
      %176 = tpu.memref_slice %arg4[%159, %c2_i32_146] : memref<4x4x!tpu.dma_semaphore, #tpu.memory_space<semaphore_mem>> -> memref<1x1x!tpu.dma_semaphore, #tpu.memory_space<semaphore_mem>>
      %177 = tpu.memref_squeeze %176 : memref<1x1x!tpu.dma_semaphore, #tpu.memory_space<semaphore_mem>> -> memref<!tpu.dma_semaphore, #tpu.memory_space<semaphore_mem>>
      tpu.wait_dma2 semaphore(%177 : memref<!tpu.dma_semaphore, #tpu.memory_space<semaphore_mem>>) src(%173 : memref<256xf32, #tpu.memory_space<any>>) dst(%175 : memref<256xf32, #tpu.memory_space<any>>)
      %c0_i32_149 = arith.constant 0 : i32
      %c0_i32_150 = arith.constant 0 : i32
      %c0_i32_151 = arith.constant 0 : i32
      %c0_i32_152 = arith.constant 0 : i32
      %c0_i32_153 = arith.constant 0 : i32
      %c3_i32_154 = arith.constant 3 : i32
      %c0_i32_155 = arith.constant 0 : i32
      %178 = tpu.memref_slice %arg2[%c0_i32_149, %c0_i32_150, %c0_i32_155] : memref<2x8x256xf32, #tpu.memory_space<any>> -> memref<1x1x256xf32, #tpu.memory_space<any>>
      %179 = tpu.memref_squeeze %178 : memref<1x1x256xf32, #tpu.memory_space<any>> -> memref<256xf32, #tpu.memory_space<any>>
      %c0_i32_156 = arith.constant 0 : i32
      %180 = tpu.memref_slice %arg3[%c0_i32_151, %c0_i32_152, %c0_i32_153, %c0_i32_156] : memref<2x8x4x256xf32, #tpu.memory_space<any>> -> memref<1x1x1x256xf32, #tpu.memory_space<any>>
      %181 = tpu.memref_squeeze %180 : memref<1x1x1x256xf32, #tpu.memory_space<any>> -> memref<256xf32, #tpu.memory_space<any>>
      %182 = tpu.memref_slice %arg4[%159, %c3_i32_154] : memref<4x4x!tpu.dma_semaphore, #tpu.memory_space<semaphore_mem>> -> memref<1x1x!tpu.dma_semaphore, #tpu.memory_space<semaphore_mem>>
      %183 = tpu.memref_squeeze %182 : memref<1x1x!tpu.dma_semaphore, #tpu.memory_space<semaphore_mem>> -> memref<!tpu.dma_semaphore, #tpu.memory_space<semaphore_mem>>
      tpu.wait_dma2 semaphore(%183 : memref<!tpu.dma_semaphore, #tpu.memory_space<semaphore_mem>>) src(%179 : memref<256xf32, #tpu.memory_space<any>>) dst(%181 : memref<256xf32, #tpu.memory_space<any>>)
      %c4_i32_157 = arith.constant 4 : i32
      %184 = arith.addi %158, %c4_i32_157 : i32
      %c8_i32_158 = arith.constant 8 : i32
      %185 = arith.cmpi slt, %184, %c8_i32_158 : i32
      %186 = arith.extui %185 : i1 to i32
      %c0_i32_159 = arith.constant 0 : i32
      %187 = arith.cmpi ne, %186, %c0_i32_159 : i32
      scf.if %187 {
        %c4_i32_160 = arith.constant 4 : i32
        %188 = arith.addi %158, %c4_i32_160 : i32
        %c8_i32_161 = arith.constant 8 : i32
        %189 = arith.muli %arg0, %c8_i32_161 : i32
        %190 = arith.addi %189, %188 : i32
        %c4_i32_162 = arith.constant 4 : i32
        %191 = arith.muli %190, %c4_i32_162 : i32
        %c0_i32_163 = arith.constant 0 : i32
        %192 = arith.addi %191, %c0_i32_163 : i32
        %193 = arith.index_cast %192 : i32 to index
        %194 = memref.load %arg1[%193] : memref<64xi32, #tpu.memory_space<smem>>
        %c0_i32_164 = arith.constant 0 : i32
        %c0_i32_165 = arith.constant 0 : i32
        %c0_i32_166 = arith.constant 0 : i32
        %195 = tpu.memref_slice %arg2[%arg0, %194, %c0_i32_166] : memref<2x8x256xf32, #tpu.memory_space<any>> -> memref<1x1x256xf32, #tpu.memory_space<any>>
        %196 = tpu.memref_squeeze %195 : memref<1x1x256xf32, #tpu.memory_space<any>> -> memref<256xf32, #tpu.memory_space<any>>
        %c0_i32_167 = arith.constant 0 : i32
        %197 = tpu.memref_slice %arg3[%arg0, %188, %c0_i32_164, %c0_i32_167] : memref<2x8x4x256xf32, #tpu.memory_space<any>> -> memref<1x1x1x256xf32, #tpu.memory_space<any>>
        %198 = tpu.memref_squeeze %197 : memref<1x1x1x256xf32, #tpu.memory_space<any>> -> memref<256xf32, #tpu.memory_space<any>>
        %199 = tpu.memref_slice %arg4[%159, %c0_i32_165] : memref<4x4x!tpu.dma_semaphore, #tpu.memory_space<semaphore_mem>> -> memref<1x1x!tpu.dma_semaphore, #tpu.memory_space<semaphore_mem>>
        %200 = tpu.memref_squeeze %199 : memref<1x1x!tpu.dma_semaphore, #tpu.memory_space<semaphore_mem>> -> memref<!tpu.dma_semaphore, #tpu.memory_space<semaphore_mem>>
        tpu.enqueue_dma source(%196 : memref<256xf32, #tpu.memory_space<any>>) target(%198 : memref<256xf32, #tpu.memory_space<any>>) target_semaphore(%200 : memref<!tpu.dma_semaphore, #tpu.memory_space<semaphore_mem>>)
        %c1_i32_168 = arith.constant 1 : i32
        %201 = arith.addi %191, %c1_i32_168 : i32
        %202 = arith.index_cast %201 : i32 to index
        %203 = memref.load %arg1[%202] : memref<64xi32, #tpu.memory_space<smem>>
        %c1_i32_169 = arith.constant 1 : i32
        %c1_i32_170 = arith.constant 1 : i32
        %c0_i32_171 = arith.constant 0 : i32
        %204 = tpu.memref_slice %arg2[%arg0, %203, %c0_i32_171] : memref<2x8x256xf32, #tpu.memory_space<any>> -> memref<1x1x256xf32, #tpu.memory_space<any>>
        %205 = tpu.memref_squeeze %204 : memref<1x1x256xf32, #tpu.memory_space<any>> -> memref<256xf32, #tpu.memory_space<any>>
        %c0_i32_172 = arith.constant 0 : i32
        %206 = tpu.memref_slice %arg3[%arg0, %188, %c1_i32_169, %c0_i32_172] : memref<2x8x4x256xf32, #tpu.memory_space<any>> -> memref<1x1x1x256xf32, #tpu.memory_space<any>>
        %207 = tpu.memref_squeeze %206 : memref<1x1x1x256xf32, #tpu.memory_space<any>> -> memref<256xf32, #tpu.memory_space<any>>
        %208 = tpu.memref_slice %arg4[%159, %c1_i32_170] : memref<4x4x!tpu.dma_semaphore, #tpu.memory_space<semaphore_mem>> -> memref<1x1x!tpu.dma_semaphore, #tpu.memory_space<semaphore_mem>>
        %209 = tpu.memref_squeeze %208 : memref<1x1x!tpu.dma_semaphore, #tpu.memory_space<semaphore_mem>> -> memref<!tpu.dma_semaphore, #tpu.memory_space<semaphore_mem>>
        tpu.enqueue_dma source(%205 : memref<256xf32, #tpu.memory_space<any>>) target(%207 : memref<256xf32, #tpu.memory_space<any>>) target_semaphore(%209 : memref<!tpu.dma_semaphore, #tpu.memory_space<semaphore_mem>>)
        %c2_i32_173 = arith.constant 2 : i32
        %210 = arith.addi %191, %c2_i32_173 : i32
        %211 = arith.index_cast %210 : i32 to index
        %212 = memref.load %arg1[%211] : memref<64xi32, #tpu.memory_space<smem>>
        %c2_i32_174 = arith.constant 2 : i32
        %c2_i32_175 = arith.constant 2 : i32
        %c0_i32_176 = arith.constant 0 : i32
        %213 = tpu.memref_slice %arg2[%arg0, %212, %c0_i32_176] : memref<2x8x256xf32, #tpu.memory_space<any>> -> memref<1x1x256xf32, #tpu.memory_space<any>>
        %214 = tpu.memref_squeeze %213 : memref<1x1x256xf32, #tpu.memory_space<any>> -> memref<256xf32, #tpu.memory_space<any>>
        %c0_i32_177 = arith.constant 0 : i32
        %215 = tpu.memref_slice %arg3[%arg0, %188, %c2_i32_174, %c0_i32_177] : memref<2x8x4x256xf32, #tpu.memory_space<any>> -> memref<1x1x1x256xf32, #tpu.memory_space<any>>
        %216 = tpu.memref_squeeze %215 : memref<1x1x1x256xf32, #tpu.memory_space<any>> -> memref<256xf32, #tpu.memory_space<any>>
        %217 = tpu.memref_slice %arg4[%159, %c2_i32_175] : memref<4x4x!tpu.dma_semaphore, #tpu.memory_space<semaphore_mem>> -> memref<1x1x!tpu.dma_semaphore, #tpu.memory_space<semaphore_mem>>
        %218 = tpu.memref_squeeze %217 : memref<1x1x!tpu.dma_semaphore, #tpu.memory_space<semaphore_mem>> -> memref<!tpu.dma_semaphore, #tpu.memory_space<semaphore_mem>>
        tpu.enqueue_dma source(%214 : memref<256xf32, #tpu.memory_space<any>>) target(%216 : memref<256xf32, #tpu.memory_space<any>>) target_semaphore(%218 : memref<!tpu.dma_semaphore, #tpu.memory_space<semaphore_mem>>)
        %c3_i32_178 = arith.constant 3 : i32
        %219 = arith.addi %191, %c3_i32_178 : i32
        %220 = arith.index_cast %219 : i32 to index
        %221 = memref.load %arg1[%220] : memref<64xi32, #tpu.memory_space<smem>>
        %c3_i32_179 = arith.constant 3 : i32
        %c3_i32_180 = arith.constant 3 : i32
        %c0_i32_181 = arith.constant 0 : i32
        %222 = tpu.memref_slice %arg2[%arg0, %221, %c0_i32_181] : memref<2x8x256xf32, #tpu.memory_space<any>> -> memref<1x1x256xf32, #tpu.memory_space<any>>
        %223 = tpu.memref_squeeze %222 : memref<1x1x256xf32, #tpu.memory_space<any>> -> memref<256xf32, #tpu.memory_space<any>>
        %c0_i32_182 = arith.constant 0 : i32
        %224 = tpu.memref_slice %arg3[%arg0, %188, %c3_i32_179, %c0_i32_182] : memref<2x8x4x256xf32, #tpu.memory_space<any>> -> memref<1x1x1x256xf32, #tpu.memory_space<any>>
        %225 = tpu.memref_squeeze %224 : memref<1x1x1x256xf32, #tpu.memory_space<any>> -> memref<256xf32, #tpu.memory_space<any>>
        %226 = tpu.memref_slice %arg4[%159, %c3_i32_180] : memref<4x4x!tpu.dma_semaphore, #tpu.memory_space<semaphore_mem>> -> memref<1x1x!tpu.dma_semaphore, #tpu.memory_space<semaphore_mem>>
        %227 = tpu.memref_squeeze %226 : memref<1x1x!tpu.dma_semaphore, #tpu.memory_space<semaphore_mem>> -> memref<!tpu.dma_semaphore, #tpu.memory_space<semaphore_mem>>
        tpu.enqueue_dma source(%223 : memref<256xf32, #tpu.memory_space<any>>) target(%225 : memref<256xf32, #tpu.memory_space<any>>) target_semaphore(%227 : memref<!tpu.dma_semaphore, #tpu.memory_space<semaphore_mem>>)
      } else {
      }
    }
    %c8_i32_121 = arith.constant 8 : i32
    return
  }
}

</mosaic_0001>

<llo_original>
// kernel: tpu_custom_call.1
$region0: #{tpu_custom_call.1}
  #allocation0 [shape = 'u32[]', space=smem, size = 0x4, offset = 0x4, fixed_abs, tag = 'smem constant byte address 0x4 - core index']
  #allocation1 [shape = 'u32[144,128]{1,0:T(1,128)}', space=vmem, size = 0x12000, scoped, tag = 'internal scratch']
  #allocation2 [shape = 's32[16]{0}', space=sflag, size = 0x40, scoped, tag = 'scratch operand']
  #allocation3 [shape = 's32[1]{0}', space=sflag, size = 0x4, scoped, tag = 'scoped memory for tpu_custom_call.1']
  #allocation4 [shape = 'u8[512]{0}', space=smem, size = 0x200, scoped, tag = 'prefetched SMEM operand 0']
  #allocation5 [shape = 's32[]', space=sflag, size = 0x4, offset = 0, fixed_abs, tag = 'sflag constant byte address 0x0 - dummy sync flag']
  #allocation7 [shape = 's32[]', space=sflag, size = 0x4, offset = 0, fixed_abs, tag = 'sflag constant byte address 0x0 - dummy sync flag']
  #allocation9 [shape = 's32[]', space=sflag, size = 0x4, offset = 0, fixed_abs, tag = 'sflag constant byte address 0x0 - dummy sync flag']
  #allocation11 [shape = 's32[]', space=sflag, size = 0x4, offset = 0, fixed_abs, tag = 'sflag constant byte address 0x0 - dummy sync flag']
  #allocation13 [shape = 's32[]', space=sflag, size = 0x4, offset = 0, fixed_abs, tag = 'sflag constant byte address 0x0 - dummy sync flag']
  #allocation15 [shape = 's32[]', space=sflag, size = 0x4, offset = 0, fixed_abs, tag = 'sflag constant byte address 0x0 - dummy sync flag']
  #allocation17 [shape = 's32[]', space=sflag, size = 0x4, offset = 0, fixed_abs, tag = 'sflag constant byte address 0x0 - dummy sync flag']
  #allocation19 [shape = 's32[]', space=sflag, size = 0x4, offset = 0, fixed_abs, tag = 'sflag constant byte address 0x0 - dummy sync flag']
  #allocation21 [shape = 's32[]', space=sflag, size = 0x4, offset = 0, fixed_abs, tag = 'sflag constant byte address 0x0 - dummy sync flag']
  #allocation23 [shape = 's32[]', space=sflag, size = 0x4, offset = 0, fixed_abs, tag = 'sflag constant byte address 0x0 - dummy sync flag']
  #allocation25 [shape = 's32[]', space=sflag, size = 0x4, offset = 0, fixed_abs, tag = 'sflag constant byte address 0x0 - dummy sync flag']
  #allocation27 [shape = 's32[]', space=sflag, size = 0x4, offset = 0, fixed_abs, tag = 'sflag constant byte address 0x0 - dummy sync flag']
  #allocation29 [shape = 's32[]', space=sflag, size = 0x4, offset = 0, fixed_abs, tag = 'sflag constant byte address 0x0 - dummy sync flag']
  #allocation31 [shape = 's32[]', space=sflag, size = 0x4, offset = 0, fixed_abs, tag = 'sflag constant byte address 0x0 - dummy sync flag']
  #allocation33 [shape = 's32[]', space=sflag, size = 0x4, offset = 0, fixed_abs, tag = 'sflag constant byte address 0x0 - dummy sync flag']
  #allocation35 [shape = 's32[]', space=sflag, size = 0x4, offset = 0, fixed_abs, tag = 'sflag constant byte address 0x0 - dummy sync flag']
  #allocation37 [shape = 's32[]', space=sflag, size = 0x4, offset = 0, fixed_abs, tag = 'sflag constant byte address 0x0 - dummy sync flag']
  #allocation39 [shape = 's32[]', space=sflag, size = 0x4, offset = 0, fixed_abs, tag = 'sflag constant byte address 0x0 - dummy sync flag']
  #allocation41 [shape = 's32[]', space=sflag, size = 0x4, offset = 0, fixed_abs, tag = 'sflag constant byte address 0x0 - dummy sync flag']
  #allocation43 [shape = 's32[]', space=sflag, size = 0x4, offset = 0, fixed_abs, tag = 'sflag constant byte address 0x0 - dummy sync flag']
  %s0 = inlined_call_operand.hbm [shape: s32[64], index: 0, kind: input, shape index: {}]
  %s1 = inlined_call_operand.hbm [shape: f32[2,8,256], index: 1, kind: input, shape index: {}]
  %s2 = inlined_call_operand.hbm [shape: f32[2,8,4,256], index: 2, kind: output, shape index: {}]
  %s3 = sld [smem:[#allocation0]]
  $region20: #{tpu_custom_call.1} parent=0
    _
  %s5 = ssub.s32 1, %s3
  %s6 = scalar_select 0, %s5, %s3
  %8 = dma.hbm_to_smem %s0, 16, [#allocation4], [#allocation3]
  %9 = dma.done [#allocation3], 16
  %10 = sfence
  loop: start=0, step=1, limit=2
  $region2: #{tpu_custom_call.1} parent=0 // loop_pre_header
    _
  $region3: #{tpu_custom_call.1} parent=0 // loop_header
    %s12 = sphi 0, %s16
    %p13 = scmp.ge.s32.totalorder %s12, 2
  $region4: #{tpu_custom_call.1} parent=0 // loop_header_branch
    %15 = sbr.rel (%p13) target = $region8
  $region5: #{tpu_custom_call.1} parent=0 // loop_body
    #allocation6 [shape = 'u32[3]{0}', space=smem, size = 0xc, scoped, tag = 'DMA stride descriptor']
    #allocation8 [shape = 'u32[3]{0}', space=smem, size = 0xc, scoped, tag = 'DMA stride descriptor']
    #allocation10 [shape = 'u32[3]{0}', space=smem, size = 0xc, scoped, tag = 'DMA stride descriptor']
    #allocation12 [shape = 'u32[3]{0}', space=smem, size = 0xc, scoped, tag = 'DMA stride descriptor']
    #allocation14 [shape = 'u32[3]{0}', space=smem, size = 0xc, scoped, tag = 'DMA stride descriptor']
    #allocation16 [shape = 'u32[3]{0}', space=smem, size = 0xc, scoped, tag = 'DMA stride descriptor']
    #allocation18 [shape = 'u32[3]{0}', space=smem, size = 0xc, scoped, tag = 'DMA stride descriptor']
    #allocation20 [shape = 'u32[3]{0}', space=smem, size = 0xc, scoped, tag = 'DMA stride descriptor']
    #allocation22 [shape = 'u32[3]{0}', space=smem, size = 0xc, scoped, tag = 'DMA stride descriptor']
    #allocation24 [shape = 'u32[3]{0}', space=smem, size = 0xc, scoped, tag = 'DMA stride descriptor']
    #allocation26 [shape = 'u32[3]{0}', space=smem, size = 0xc, scoped, tag = 'DMA stride descriptor']
    #allocation28 [shape = 'u32[3]{0}', space=smem, size = 0xc, scoped, tag = 'DMA stride descriptor']
    #allocation30 [shape = 'u32[3]{0}', space=smem, size = 0xc, scoped, tag = 'DMA stride descriptor']
    #allocation32 [shape = 'u32[3]{0}', space=smem, size = 0xc, scoped, tag = 'DMA stride descriptor']
    #allocation34 [shape = 'u32[3]{0}', space=smem, size = 0xc, scoped, tag = 'DMA stride descriptor']
    #allocation36 [shape = 'u32[3]{0}', space=smem, size = 0xc, scoped, tag = 'DMA stride descriptor']
    %s17 = sadd.s32 %s12, 1
    %s18 = smul.u32 %s12, 32
    %s19 = sld [smem:[#allocation4 + %s18]]
    %s20 = sshrl.u32 %s19, 3
    %s21 = sand.u32 %s19, 7
    %s22 = smul.u32 %s20, 16
    %s23 = sadd.s32 %s21, %s22
    %s24 = smul.u32 %s12, 16
    %s25 = sadd.s32 %s23, %s24
    %s26 = smul.addr %s25, 16
    %s27 = scalar_lea.hbm %s1, %s26
    %s28 = smul.u32 %s12, 64
    %s29 = smul.addr %s28, 16
    %s30 = scalar_lea.hbm %s2, %s29
    %s32 = sshll.u32 1, 14
    %s33 = sxor.u32 4294967295, %s32
    %s36 = sshll.u32 3, 24
    %s37 = sxor.u32 4294967295, %s36
    %s38 = sand.u32 0, %s37
    %s40 = sor.u32 %s38, 0
    %43 = sst [smem:[#allocation6]] 128
    %s44 = scalar_lea.smem [#allocation6], 1
    %45 = sst [smem:[%s44]] 64
    %s46 = scalar_lea.smem [#allocation6], 2
    %47 = sst [smem:[%s46]] 1
    %49 = dma.general %s27, 32, %s30, [#allocation2], [#allocation5], [#allocation6], %s40, 0
    %s50 = sadd.s32 %s18, 1
    %s51 = sld [smem:[#allocation4 + %s50]]
    %s52 = sshrl.u32 %s51, 3
    %s53 = sand.u32 %s51, 7
    %s54 = smul.u32 %s52, 16
    %s55 = sadd.s32 %s53, %s54
    %s56 = sadd.s32 %s55, %s24
    %s57 = smul.addr %s56, 16
    %s58 = scalar_lea.hbm %s1, %s57
    %s59 = sadd.s32 1, %s28
    %s60 = smul.addr %s59, 16
    %s61 = scalar_lea.hbm %s2, %s60
    %s62 = scalar_lea.sflag [#allocation2], 1
    %s64 = sshll.u32 1, 14
    %s65 = sxor.u32 4294967295, %s64
    %s68 = sshll.u32 3, 24
    %s69 = sxor.u32 4294967295, %s68
    %s70 = sand.u32 0, %s69
    %s72 = sor.u32 %s70, 0
    %75 = sst [smem:[#allocation8]] 128
    %s76 = scalar_lea.smem [#allocation8], 1
    %77 = sst [smem:[%s76]] 64
    %s78 = scalar_lea.smem [#allocation8], 2
    %79 = sst [smem:[%s78]] 1
    %81 = dma.general %s58, 32, %s61, %s62, [#allocation7], [#allocation8], %s72, 0
    %s82 = sadd.s32 %s18, 2
    %s83 = sld [smem:[#allocation4 + %s82]]
    %s84 = sshrl.u32 %s83, 3
    %s85 = sand.u32 %s83, 7
    %s86 = smul.u32 %s84, 16
    %s87 = sadd.s32 %s85, %s86
    %s88 = sadd.s32 %s87, %s24
    %s89 = smul.addr %s88, 16
    %s90 = scalar_lea.hbm %s1, %s89
    %s91 = sadd.s32 2, %s28
    %s92 = smul.addr %s91, 16
    %s93 = scalar_lea.hbm %s2, %s92
    %s94 = scalar_lea.sflag [#allocation2], 2
    %s96 = sshll.u32 1, 14
    %s97 = sxor.u32 4294967295, %s96
    %s100 = sshll.u32 3, 24
    %s101 = sxor.u32 4294967295, %s100
    %s102 = sand.u32 0, %s101
    %s104 = sor.u32 %s102, 0
    %107 = sst [smem:[#allocation10]] 128
    %s108 = scalar_lea.smem [#allocation10], 1
    %109 = sst [smem:[%s108]] 64
    %s110 = scalar_lea.smem [#allocation10], 2
    %111 = sst [smem:[%s110]] 1
    %113 = dma.general %s90, 32, %s93, %s94, [#allocation9], [#allocation10], %s104, 0
    %s114 = sadd.s32 %s18, 3
    %s115 = sld [smem:[#allocation4 + %s114]]
    %s116 = sshrl.u32 %s115, 3
    %s117 = sand.u32 %s115, 7
    %s118 = smul.u32 %s116, 16
    %s119 = sadd.s32 %s117, %s118
    %s120 = sadd.s32 %s119, %s24
    %s121 = smul.addr %s120, 16
    %s122 = scalar_lea.hbm %s1, %s121
    %s123 = sadd.s32 3, %s28
    %s124 = smul.addr %s123, 16
    %s125 = scalar_lea.hbm %s2, %s124
    %s126 = scalar_lea.sflag [#allocation2], 3
    %s128 = sshll.u32 1, 14
    %s129 = sxor.u32 4294967295, %s128
    %s132 = sshll.u32 3, 24
    %s133 = sxor.u32 4294967295, %s132
    %s134 = sand.u32 0, %s133
    %s136 = sor.u32 %s134, 0
    %139 = sst [smem:[#allocation12]] 128
    %s140 = scalar_lea.smem [#allocation12], 1
    %141 = sst [smem:[%s140]] 64
    %s142 = scalar_lea.smem [#allocation12], 2
    %143 = sst [smem:[%s142]] 1
    %145 = dma.general %s122, 32, %s125, %s126, [#allocation11], [#allocation12], %s136, 0
    %s146 = smul.u32 %s12, 8
    %s147 = sadd.s32 %s146, 1
    %s148 = smul.u32 %s147, 4
    %s149 = sld [smem:[#allocation4 + %s148]]
    %s150 = sshrl.u32 %s149, 3
    %s151 = sand.u32 %s149, 7
    %s152 = smul.u32 %s150, 16
    %s153 = sadd.s32 %s151, %s152
    %s154 = sadd.s32 %s153, %s24
    %s155 = smul.addr %s154, 16
    %s156 = scalar_lea.hbm %s1, %s155
    %s157 = sadd.s32 8, %s28
    %s158 = smul.addr %s157, 16
    %s159 = scalar_lea.hbm %s2, %s158
    %s160 = scalar_lea.sflag [#allocation2], 4
    %s162 = sshll.u32 1, 14
    %s163 = sxor.u32 4294967295, %s162
    %s166 = sshll.u32 3, 24
    %s167 = sxor.u32 4294967295, %s166
    %s168 = sand.u32 0, %s167
    %s170 = sor.u32 %s168, 0
    %173 = sst [smem:[#allocation14]] 128
    %s174 = scalar_lea.smem [#allocation14], 1
    %175 = sst [smem:[%s174]] 64
    %s176 = scalar_lea.smem [#allocation14], 2
    %177 = sst [smem:[%s176]] 1
    %179 = dma.general %s156, 32, %s159, %s160, [#allocation13], [#allocation14], %s170, 0
    %s180 = sadd.s32 %s148, 1
    %s181 = sld [smem:[#allocation4 + %s180]]
    %s182 = sshrl.u32 %s181, 3
    %s183 = sand.u32 %s181, 7
    %s184 = smul.u32 %s182, 16
    %s185 = sadd.s32 %s183, %s184
    %s186 = sadd.s32 %s185, %s24
    %s187 = smul.addr %s186, 16
    %s188 = scalar_lea.hbm %s1, %s187
    %s189 = sadd.s32 9, %s28
    %s190 = smul.addr %s189, 16
    %s191 = scalar_lea.hbm %s2, %s190
    %s192 = scalar_lea.sflag [#allocation2], 5
    %s194 = sshll.u32 1, 14
    %s195 = sxor.u32 4294967295, %s194
    %s198 = sshll.u32 3, 24
    %s199 = sxor.u32 4294967295, %s198
    %s200 = sand.u32 0, %s199
    %s202 = sor.u32 %s200, 0
    %205 = sst [smem:[#allocation16]] 128
    %s206 = scalar_lea.smem [#allocation16], 1
    %207 = sst [smem:[%s206]] 64
    %s208 = scalar_lea.smem [#allocation16], 2
    %209 = sst [smem:[%s208]] 1
    %211 = dma.general %s188, 32, %s191, %s192, [#allocation15], [#allocation16], %s202, 0
    %s212 = sadd.s32 %s148, 2
    %s213 = sld [smem:[#allocation4 + %s212]]
    %s214 = sshrl.u32 %s213, 3
    %s215 = sand.u32 %s213, 7
    %s216 = smul.u32 %s214, 16
    %s217 = sadd.s32 %s215, %s216
    %s218 = sadd.s32 %s217, %s24
    %s219 = smul.addr %s218, 16
    %s220 = scalar_lea.hbm %s1, %s219
    %s221 = sadd.s32 10, %s28
    %s222 = smul.addr %s221, 16
    %s223 = scalar_lea.hbm %s2, %s222
    %s224 = scalar_lea.sflag [#allocation2], 6
    %s226 = sshll.u32 1, 14
    %s227 = sxor.u32 4294967295, %s226
    %s230 = sshll.u32 3, 24
    %s231 = sxor.u32 4294967295, %s230
    %s232 = sand.u32 0, %s231
    %s234 = sor.u32 %s232, 0
    %237 = sst [smem:[#allocation18]] 128
    %s238 = scalar_lea.smem [#allocation18], 1
    %239 = sst [smem:[%s238]] 64
    %s240 = scalar_lea.smem [#allocation18], 2
    %241 = sst [smem:[%s240]] 1
    %243 = dma.general %s220, 32, %s223, %s224, [#allocation17], [#allocation18], %s234, 0
    %s244 = sadd.s32 %s148, 3
    %s245 = sld [smem:[#allocation4 + %s244]]
    %s246 = sshrl.u32 %s245, 3
    %s247 = sand.u32 %s245, 7
    %s248 = smul.u32 %s246, 16
    %s249 = sadd.s32 %s247, %s248
    %s250 = sadd.s32 %s249, %s24
    %s251 = smul.addr %s250, 16
    %s252 = scalar_lea.hbm %s1, %s251
    %s253 = sadd.s32 11, %s28
    %s254 = smul.addr %s253, 16
    %s255 = scalar_lea.hbm %s2, %s254
    %s256 = scalar_lea.sflag [#allocation2], 7
    %s258 = sshll.u32 1, 14
    %s259 = sxor.u32 4294967295, %s258
    %s262 = sshll.u32 3, 24
    %s263 = sxor.u32 4294967295, %s262
    %s264 = sand.u32 0, %s263
    %s266 = sor.u32 %s264, 0
    %269 = sst [smem:[#allocation20]] 128
    %s270 = scalar_lea.smem [#allocation20], 1
    %271 = sst [smem:[%s270]] 64
    %s272 = scalar_lea.smem [#allocation20], 2
    %273 = sst [smem:[%s272]] 1
    %275 = dma.general %s252, 32, %s255, %s256, [#allocation19], [#allocation20], %s266, 0
    %s276 = sadd.s32 %s146, 2
    %s277 = smul.u32 %s276, 4
    %s278 = sld [smem:[#allocation4 + %s277]]
    %s279 = sshrl.u32 %s278, 3
    %s280 = sand.u32 %s278, 7
    %s281 = smul.u32 %s279, 16
    %s282 = sadd.s32 %s280, %s281
    %s283 = sadd.s32 %s282, %s24
    %s284 = smul.addr %s283, 16
    %s285 = scalar_lea.hbm %s1, %s284
    %s286 = sadd.s32 16, %s28
    %s287 = smul.addr %s286, 16
    %s288 = scalar_lea.hbm %s2, %s287
    %s289 = scalar_lea.sflag [#allocation2], 8
    %s291 = sshll.u32 1, 14
    %s292 = sxor.u32 4294967295, %s291
    %s295 = sshll.u32 3, 24
    %s296 = sxor.u32 4294967295, %s295
    %s297 = sand.u32 0, %s296
    %s299 = sor.u32 %s297, 0
    %302 = sst [smem:[#allocation22]] 128
    %s303 = scalar_lea.smem [#allocation22], 1
    %304 = sst [smem:[%s303]] 64
    %s305 = scalar_lea.smem [#allocation22], 2
    %306 = sst [smem:[%s305]] 1
    %308 = dma.general %s285, 32, %s288, %s289, [#allocation21], [#allocation22], %s299, 0
    %s309 = sadd.s32 %s277, 1
    %s310 = sld [smem:[#allocation4 + %s309]]
    %s311 = sshrl.u32 %s310, 3
    %s312 = sand.u32 %s310, 7
    %s313 = smul.u32 %s311, 16
    %s314 = sadd.s32 %s312, %s313
    %s315 = sadd.s32 %s314, %s24
    %s316 = smul.addr %s315, 16
    %s317 = scalar_lea.hbm %s1, %s316
    %s318 = sadd.s32 17, %s28
    %s319 = smul.addr %s318, 16
    %s320 = scalar_lea.hbm %s2, %s319
    %s321 = scalar_lea.sflag [#allocation2], 9
    %s323 = sshll.u32 1, 14
    %s324 = sxor.u32 4294967295, %s323
    %s327 = sshll.u32 3, 24
    %s328 = sxor.u32 4294967295, %s327
    %s329 = sand.u32 0, %s328
    %s331 = sor.u32 %s329, 0
    %334 = sst [smem:[#allocation24]] 128
    %s335 = scalar_lea.smem [#allocation24], 1
    %336 = sst [smem:[%s335]] 64
    %s337 = scalar_lea.smem [#allocation24], 2
    %338 = sst [smem:[%s337]] 1
    %340 = dma.general %s317, 32, %s320, %s321, [#allocation23], [#allocation24], %s331, 0
    %s341 = sadd.s32 %s277, 2
    %s342 = sld [smem:[#allocation4 + %s341]]
    %s343 = sshrl.u32 %s342, 3
    %s344 = sand.u32 %s342, 7
    %s345 = smul.u32 %s343, 16
    %s346 = sadd.s32 %s344, %s345
    %s347 = sadd.s32 %s346, %s24
    %s348 = smul.addr %s347, 16
    %s349 = scalar_lea.hbm %s1, %s348
    %s350 = sadd.s32 18, %s28
    %s351 = smul.addr %s350, 16
    %s352 = scalar_lea.hbm %s2, %s351
    %s353 = scalar_lea.sflag [#allocation2], 10
    %s355 = sshll.u32 1, 14
    %s356 = sxor.u32 4294967295, %s355
    %s359 = sshll.u32 3, 24
    %s360 = sxor.u32 4294967295, %s359
    %s361 = sand.u32 0, %s360
    %s363 = sor.u32 %s361, 0
    %366 = sst [smem:[#allocation26]] 128
    %s367 = scalar_lea.smem [#allocation26], 1
    %368 = sst [smem:[%s367]] 64
    %s369 = scalar_lea.smem [#allocation26], 2
    %370 = sst [smem:[%s369]] 1
    %372 = dma.general %s349, 32, %s352, %s353, [#allocation25], [#allocation26], %s363, 0
    %s373 = sadd.s32 %s277, 3
    %s374 = sld [smem:[#allocation4 + %s373]]
    %s375 = sshrl.u32 %s374, 3
    %s376 = sand.u32 %s374, 7
    %s377 = smul.u32 %s375, 16
    %s378 = sadd.s32 %s376, %s377
    %s379 = sadd.s32 %s378, %s24
    %s380 = smul.addr %s379, 16
    %s381 = scalar_lea.hbm %s1, %s380
    %s382 = sadd.s32 19, %s28
    %s383 = smul.addr %s382, 16
    %s384 = scalar_lea.hbm %s2, %s383
    %s385 = scalar_lea.sflag [#allocation2], 11
    %s387 = sshll.u32 1, 14
    %s388 = sxor.u32 4294967295, %s387
    %s391 = sshll.u32 3, 24
    %s392 = sxor.u32 4294967295, %s391
    %s393 = sand.u32 0, %s392
    %s395 = sor.u32 %s393, 0
    %398 = sst [smem:[#allocation28]] 128
    %s399 = scalar_lea.smem [#allocation28], 1
    %400 = sst [smem:[%s399]] 64
    %s401 = scalar_lea.smem [#allocation28], 2
    %402 = sst [smem:[%s401]] 1
    %404 = dma.general %s381, 32, %s384, %s385, [#allocation27], [#allocation28], %s395, 0
    %s405 = sadd.s32 %s146, 3
    %s406 = smul.u32 %s405, 4
    %s407 = sld [smem:[#allocation4 + %s406]]
    %s408 = sshrl.u32 %s407, 3
    %s409 = sand.u32 %s407, 7
    %s410 = smul.u32 %s408, 16
    %s411 = sadd.s32 %s409, %s410
    %s412 = sadd.s32 %s411, %s24
    %s413 = smul.addr %s412, 16
    %s414 = scalar_lea.hbm %s1, %s413
    %s415 = sadd.s32 24, %s28
    %s416 = smul.addr %s415, 16
    %s417 = scalar_lea.hbm %s2, %s416
    %s418 = scalar_lea.sflag [#allocation2], 12
    %s420 = sshll.u32 1, 14
    %s421 = sxor.u32 4294967295, %s420
    %s424 = sshll.u32 3, 24
    %s425 = sxor.u32 4294967295, %s424
    %s426 = sand.u32 0, %s425
    %s428 = sor.u32 %s426, 0
    %431 = sst [smem:[#allocation30]] 128
    %s432 = scalar_lea.smem [#allocation30], 1
    %433 = sst [smem:[%s432]] 64
    %s434 = scalar_lea.smem [#allocation30], 2
    %435 = sst [smem:[%s434]] 1
    %437 = dma.general %s414, 32, %s417, %s418, [#allocation29], [#allocation30], %s428, 0
    %s438 = sadd.s32 %s406, 1
    %s439 = sld [smem:[#allocation4 + %s438]]
    %s440 = sshrl.u32 %s439, 3
    %s441 = sand.u32 %s439, 7
    %s442 = smul.u32 %s440, 16
    %s443 = sadd.s32 %s441, %s442
    %s444 = sadd.s32 %s443, %s24
    %s445 = smul.addr %s444, 16
    %s446 = scalar_lea.hbm %s1, %s445
    %s447 = sadd.s32 25, %s28
    %s448 = smul.addr %s447, 16
    %s449 = scalar_lea.hbm %s2, %s448
    %s450 = scalar_lea.sflag [#allocation2], 13
    %s452 = sshll.u32 1, 14
    %s453 = sxor.u32 4294967295, %s452
    %s456 = sshll.u32 3, 24
    %s457 = sxor.u32 4294967295, %s456
    %s458 = sand.u32 0, %s457
    %s460 = sor.u32 %s458, 0
    %463 = sst [smem:[#allocation32]] 128
    %s464 = scalar_lea.smem [#allocation32], 1
    %465 = sst [smem:[%s464]] 64
    %s466 = scalar_lea.smem [#allocation32], 2
    %467 = sst [smem:[%s466]] 1
    %469 = dma.general %s446, 32, %s449, %s450, [#allocation31], [#allocation32], %s460, 0
    %s470 = sadd.s32 %s406, 2
    %s471 = sld [smem:[#allocation4 + %s470]]
    %s472 = sshrl.u32 %s471, 3
    %s473 = sand.u32 %s471, 7
    %s474 = smul.u32 %s472, 16
    %s475 = sadd.s32 %s473, %s474
    %s476 = sadd.s32 %s475, %s24
    %s477 = smul.addr %s476, 16
    %s478 = scalar_lea.hbm %s1, %s477
    %s479 = sadd.s32 26, %s28
    %s480 = smul.addr %s479, 16
    %s481 = scalar_lea.hbm %s2, %s480
    %s482 = scalar_lea.sflag [#allocation2], 14
    %s484 = sshll.u32 1, 14
    %s485 = sxor.u32 4294967295, %s484
    %s488 = sshll.u32 3, 24
    %s489 = sxor.u32 4294967295, %s488
    %s490 = sand.u32 0, %s489
    %s492 = sor.u32 %s490, 0
    %495 = sst [smem:[#allocation34]] 128
    %s496 = scalar_lea.smem [#allocation34], 1
    %497 = sst [smem:[%s496]] 64
    %s498 = scalar_lea.smem [#allocation34], 2
    %499 = sst [smem:[%s498]] 1
    %501 = dma.general %s478, 32, %s481, %s482, [#allocation33], [#allocation34], %s492, 0
    %s502 = sadd.s32 %s406, 3
    %s503 = sld [smem:[#allocation4 + %s502]]
    %s504 = sshrl.u32 %s503, 3
    %s505 = sand.u32 %s503, 7
    %s506 = smul.u32 %s504, 16
    %s507 = sadd.s32 %s505, %s506
    %s508 = sadd.s32 %s507, %s24
    %s509 = smul.addr %s508, 16
    %s510 = scalar_lea.hbm %s1, %s509
    %s511 = sadd.s32 27, %s28
    %s512 = smul.addr %s511, 16
    %s513 = scalar_lea.hbm %s2, %s512
    %s514 = scalar_lea.sflag [#allocation2], 15
    %s516 = sshll.u32 1, 14
    %s517 = sxor.u32 4294967295, %s516
    %s520 = sshll.u32 3, 24
    %s521 = sxor.u32 4294967295, %s520
    %s522 = sand.u32 0, %s521
    %s524 = sor.u32 %s522, 0
    %527 = sst [smem:[#allocation36]] 128
    %s528 = scalar_lea.smem [#allocation36], 1
    %529 = sst [smem:[%s528]] 64
    %s530 = scalar_lea.smem [#allocation36], 2
    %531 = sst [smem:[%s530]] 1
    %533 = dma.general %s510, 32, %s513, %s514, [#allocation35], [#allocation36], %s524, 0
    loop: start=0, step=1, limit=8
    $region9: #{tpu_custom_call.1} parent=5 // loop_pre_header
      _
    $region10: #{tpu_custom_call.1} parent=5 // loop_header
      %s535 = sphi 0, %s539
      %p536 = scmp.ge.s32.totalorder %s535, 8
    $region11: #{tpu_custom_call.1} parent=5 // loop_header_branch
      %538 = sbr.rel (%p536) target = $region15
    $region12: #{tpu_custom_call.1} parent=5 // loop_body
      %s540 = sand.u32 %s535, 3
      %s541 = smul.u32 %s540, 4
      %s542 = scalar_lea.sflag [#allocation2], %s541
      %544 = dma.done %s542, 32
      %s545 = sadd.s32 1, %s541
      %s546 = scalar_lea.sflag [#allocation2], %s545
      %548 = dma.done %s546, 32
      %s549 = sadd.s32 2, %s541
      %s550 = scalar_lea.sflag [#allocation2], %s549
      %552 = dma.done %s550, 32
      %s553 = sadd.s32 3, %s541
      %s554 = scalar_lea.sflag [#allocation2], %s553
      %556 = dma.done %s554, 32
      %s557 = sadd.s32 %s535, 4
      %p558 = scmp.lt.s32.totalorder %s557, 8
      // Predicated region
      $region16: #{tpu_custom_call.1} parent=12 // pred_check
        %p559 = pneg %p558
      $region17: #{tpu_custom_call.1} parent=12 // pred_check_branch
        %561 = sbr.rel (%p559) target = $region19
      $region18: #{tpu_custom_call.1} parent=12 // pred_region
        #allocation38 [shape = 'u32[3]{0}', space=smem, size = 0xc, scoped, tag = 'DMA stride descriptor']
        #allocation40 [shape = 'u32[3]{0}', space=smem, size = 0xc, scoped, tag = 'DMA stride descriptor']
        #allocation42 [shape = 'u32[3]{0}', space=smem, size = 0xc, scoped, tag = 'DMA stride descriptor']
        #allocation44 [shape = 'u32[3]{0}', space=smem, size = 0xc, scoped, tag = 'DMA stride descriptor']
        %s562 = sadd.s32 %s146, %s557
        %s563 = smul.u32 %s562, 4
        %s564 = sld [smem:[#allocation4 + %s563]]
        %s565 = sshrl.u32 %s564, 3
        %s566 = sand.u32 %s564, 7
        %s567 = smul.u32 %s565, 16
        %s568 = sadd.s32 %s566, %s567
        %s569 = sadd.s32 %s568, %s24
        %s570 = smul.addr %s569, 16
        %s571 = scalar_lea.hbm %s1, %s570
        %s572 = smul.u32 %s557, 8
        %s573 = sadd.s32 %s572, %s28
        %s574 = smul.addr %s573, 16
        %s575 = scalar_lea.hbm %s2, %s574
        %s577 = sshll.u32 1, 14
        %s578 = sxor.u32 4294967295, %s577
        %s581 = sshll.u32 3, 24
        %s582 = sxor.u32 4294967295, %s581
        %s583 = sand.u32 0, %s582
        %s585 = sor.u32 %s583, 0
        %588 = sst [smem:[#allocation38]] 128
        %s589 = scalar_lea.smem [#allocation38], 1
        %590 = sst [smem:[%s589]] 64
        %s591 = scalar_lea.smem [#allocation38], 2
        %592 = sst [smem:[%s591]] 1
        %594 = dma.general %s571, 32, %s575, %s542, [#allocation37], [#allocation38], %s585, 0
        %s595 = sadd.s32 %s563, 1
        %s596 = sld [smem:[#allocation4 + %s595]]
        %s597 = sshrl.u32 %s596, 3
        %s598 = sand.u32 %s596, 7
        %s599 = smul.u32 %s597, 16
        %s600 = sadd.s32 %s598, %s599
        %s601 = sadd.s32 %s600, %s24
        %s602 = smul.addr %s601, 16
        %s603 = scalar_lea.hbm %s1, %s602
        %s604 = sadd.s32 1, %s572
        %s605 = sadd.s32 %s604, %s28
        %s606 = smul.addr %s605, 16
        %s607 = scalar_lea.hbm %s2, %s606
        %s609 = sshll.u32 1, 14
        %s610 = sxor.u32 4294967295, %s609
        %s613 = sshll.u32 3, 24
        %s614 = sxor.u32 4294967295, %s613
        %s615 = sand.u32 0, %s614
        %s617 = sor.u32 %s615, 0
        %620 = sst [smem:[#allocation40]] 128
        %s621 = scalar_lea.smem [#allocation40], 1
        %622 = sst [smem:[%s621]] 64
        %s623 = scalar_lea.smem [#allocation40], 2
        %624 = sst [smem:[%s623]] 1
        %626 = dma.general %s603, 32, %s607, %s546, [#allocation39], [#allocation40], %s617, 0
        %s627 = sadd.s32 %s563, 2
        %s628 = sld [smem:[#allocation4 + %s627]]
        %s629 = sshrl.u32 %s628, 3
        %s630 = sand.u32 %s628, 7
        %s631 = smul.u32 %s629, 16
        %s632 = sadd.s32 %s630, %s631
        %s633 = sadd.s32 %s632, %s24
        %s634 = smul.addr %s633, 16
        %s635 = scalar_lea.hbm %s1, %s634
        %s636 = sadd.s32 2, %s572
        %s637 = sadd.s32 %s636, %s28
        %s638 = smul.addr %s637, 16
        %s639 = scalar_lea.hbm %s2, %s638
        %s641 = sshll.u32 1, 14
        %s642 = sxor.u32 4294967295, %s641
        %s645 = sshll.u32 3, 24
        %s646 = sxor.u32 4294967295, %s645
        %s647 = sand.u32 0, %s646
        %s649 = sor.u32 %s647, 0
        %652 = sst [smem:[#allocation42]] 128
        %s653 = scalar_lea.smem [#allocation42], 1
        %654 = sst [smem:[%s653]] 64
        %s655 = scalar_lea.smem [#allocation42], 2
        %656 = sst [smem:[%s655]] 1
        %658 = dma.general %s635, 32, %s639, %s550, [#allocation41], [#allocation42], %s649, 0
        %s659 = sadd.s32 %s563, 3
        %s660 = sld [smem:[#allocation4 + %s659]]
        %s661 = sshrl.u32 %s660, 3
        %s662 = sand.u32 %s660, 7
        %s663 = smul.u32 %s661, 16
        %s664 = sadd.s32 %s662, %s663
        %s665 = sadd.s32 %s664, %s24
        %s666 = smul.addr %s665, 16
        %s667 = scalar_lea.hbm %s1, %s666
        %s668 = sadd.s32 3, %s572
        %s669 = sadd.s32 %s668, %s28
        %s670 = smul.addr %s669, 16
        %s671 = scalar_lea.hbm %s2, %s670
        %s673 = sshll.u32 1, 14
        %s674 = sxor.u32 4294967295, %s673
        %s677 = sshll.u32 3, 24
        %s678 = sxor.u32 4294967295, %s677
        %s679 = sand.u32 0, %s678
        %s681 = sor.u32 %s679, 0
        %684 = sst [smem:[#allocation44]] 128
        %s685 = scalar_lea.smem [#allocation44], 1
        %686 = sst [smem:[%s685]] 64
        %s687 = scalar_lea.smem [#allocation44], 2
        %688 = sst [smem:[%s687]] 1
        %690 = dma.general %s667, 32, %s671, %s554, [#allocation43], [#allocation44], %s681, 0
      $region19: #{tpu_custom_call.1} parent=12 // pred_fallthru
        _
    $region13: #{tpu_custom_call.1} parent=5 // loop_footer
      %s539 = sadd.s32 1, %s535
    $region14: #{tpu_custom_call.1} parent=5 // loop_footer_branch
      %534 = sbr.rel target = $region10
    $region15: #{tpu_custom_call.1} parent=5 // loop_exit
      _
  $region6: #{tpu_custom_call.1} parent=0 // loop_footer
    %s16 = sadd.s32 1, %s12
  $region7: #{tpu_custom_call.1} parent=0 // loop_footer_branch
    %11 = sbr.rel target = $region3
  $region8: #{tpu_custom_call.1} parent=0 // loop_exit
    _
  %691 = vsyncmov [#allocation2]
  %s692 = vpop.sfrf %691
  %p693 = scmp.eq.s32.totalorder %s692, 0
  %p694 = pneg %p693
  %696 = shalt.err (%p694)
  %s697 = scalar_lea.sflag [#allocation2], 1
  %698 = vsyncmov %s697
  %s699 = vpop.sfrf %698
  %p700 = scmp.eq.s32.totalorder %s699, 0
  %p701 = pneg %p700
  %703 = shalt.err (%p701)
  %s704 = scalar_lea.sflag [#allocation2], 2
  %705 = vsyncmov %s704
  %s706 = vpop.sfrf %705
  %p707 = scmp.eq.s32.totalorder %s706, 0
  %p708 = pneg %p707
  %710 = shalt.err (%p708)
  %s711 = scalar_lea.sflag [#allocation2], 3
  %712 = vsyncmov %s711
  %s713 = vpop.sfrf %712
  %p714 = scmp.eq.s32.totalorder %s713, 0
  %p715 = pneg %p714
  %717 = shalt.err (%p715)
  %s718 = scalar_lea.sflag [#allocation2], 4
  %719 = vsyncmov %s718
  %s720 = vpop.sfrf %719
  %p721 = scmp.eq.s32.totalorder %s720, 0
  %p722 = pneg %p721
  %724 = shalt.err (%p722)
  %s725 = scalar_lea.sflag [#allocation2], 5
  %726 = vsyncmov %s725
  %s727 = vpop.sfrf %726
  %p728 = scmp.eq.s32.totalorder %s727, 0
  %p729 = pneg %p728
  %731 = shalt.err (%p729)
  %s732 = scalar_lea.sflag [#allocation2], 6
  %733 = vsyncmov %s732
  %s734 = vpop.sfrf %733
  %p735 = scmp.eq.s32.totalorder %s734, 0
  %p736 = pneg %p735
  %738 = shalt.err (%p736)
  %s739 = scalar_lea.sflag [#allocation2], 7
  %740 = vsyncmov %s739
  %s741 = vpop.sfrf %740
  %p742 = scmp.eq.s32.totalorder %s741, 0
  %p743 = pneg %p742
  %745 = shalt.err (%p743)
  %s746 = scalar_lea.sflag [#allocation2], 8
  %747 = vsyncmov %s746
  %s748 = vpop.sfrf %747
  %p749 = scmp.eq.s32.totalorder %s748, 0
  %p750 = pneg %p749
  %752 = shalt.err (%p750)
  %s753 = scalar_lea.sflag [#allocation2], 9
  %754 = vsyncmov %s753
  %s755 = vpop.sfrf %754
  %p756 = scmp.eq.s32.totalorder %s755, 0
  %p757 = pneg %p756
  %759 = shalt.err (%p757)
  %s760 = scalar_lea.sflag [#allocation2], 10
  %761 = vsyncmov %s760
  %s762 = vpop.sfrf %761
  %p763 = scmp.eq.s32.totalorder %s762, 0
  %p764 = pneg %p763
  %766 = shalt.err (%p764)
  %s767 = scalar_lea.sflag [#allocation2], 11
  %768 = vsyncmov %s767
  %s769 = vpop.sfrf %768
  %p770 = scmp.eq.s32.totalorder %s769, 0
  %p771 = pneg %p770
  %773 = shalt.err (%p771)
  %s774 = scalar_lea.sflag [#allocation2], 12
  %775 = vsyncmov %s774
  %s776 = vpop.sfrf %775
  %p777 = scmp.eq.s32.totalorder %s776, 0
  %p778 = pneg %p777
  %780 = shalt.err (%p778)
  %s781 = scalar_lea.sflag [#allocation2], 13
  %782 = vsyncmov %s781
  %s783 = vpop.sfrf %782
  %p784 = scmp.eq.s32.totalorder %s783, 0
  %p785 = pneg %p784
  %787 = shalt.err (%p785)
  %s788 = scalar_lea.sflag [#allocation2], 14
  %789 = vsyncmov %s788
  %s790 = vpop.sfrf %789
  %p791 = scmp.eq.s32.totalorder %s790, 0
  %p792 = pneg %p791
  %794 = shalt.err (%p792)
  %s795 = scalar_lea.sflag [#allocation2], 15
  %796 = vsyncmov %s795
  %s797 = vpop.sfrf %796
  %p798 = scmp.eq.s32.totalorder %s797, 0
  %p799 = pneg %p798
  %801 = shalt.err (%p799)

</llo_original>
